<compile_context>
chip_gen: v7x
topology: tpu7x:2x2x1
jax: 0.10.0
libtpu: 0.0.40
codegen_flags: <defaults>
</compile_context>

<pallas_src>
import functools

import jax
import jax.numpy as jnp
import numpy as np
from jax import lax
from jax.experimental import pallas as pl
from jax.experimental.pallas import tpu as pltpu


def _spatial_attention_kernel(x_ref, wmask_ref, o_ref, avg_buf, max_buf,
                              *, B, C, HW, W, K, HALO):
    """One block of B images per grid step.

    x_ref     : (B, C, HW)          VMEM  input block (HW lane-dense)
    wmask_ref : (2*K*K, HW) f32     VMEM  conv taps with border-validity mask folded in
                                          (rows [0,K*K) = avg channel, [K*K,2K*K) = max)
    o_ref     : (B, 1, HW)          VMEM  sigmoid(conv) output block
    avg_buf   : (B, 2*HALO+HW) f32  VMEM  row-padded flat avg map (zero halos)
    max_buf   : (B, 2*HALO+HW) f32  VMEM  row-padded flat max map
    """
    pad = (K - 1) // 2
    KK = K * K

    # ---- streamed channel mean / max (bounded live vregs, VMEM read once) ----
    CC = max(1, min(8, C, 16384 // max(1, B * HW)))      # channels per chunk
    n_full = C // CC
    rem = C - n_full * CC

    def _chunk_stats(start, size):
        blk = x_ref[:, pl.ds(start, size), :].astype(jnp.float32)   # (B, size, HW)
        return jnp.sum(blk, axis=1), jnp.max(blk, axis=1)

    def _body(i, carry):
        s, m = carry
        cs, cm = _chunk_stats(pl.multiple_of(i * CC, CC), CC)
        return s + cs, jnp.maximum(m, cm)

    s = jnp.zeros((B, HW), jnp.float32)
    m = jnp.full((B, HW), -jnp.inf, jnp.float32)
    unroll = n_full if n_full <= 16 else 8
    s, m = lax.fori_loop(0, n_full, _body, (s, m), unroll=unroll)
    if rem:
        cs, cm = _chunk_stats(n_full * CC, rem)
        s, m = s + cs, jnp.maximum(m, cm)
    avg = s * (1.0 / C)

    # ---- stage pooled maps into row-padded flat buffers (128-aligned stores).
    # Halos re-zeroed every step on purpose: scratch is per-core and persistent,
    # so this must NOT be gated on program_id (v7x megacore).
    zero_halo = jnp.zeros((B, HALO), jnp.float32)
    avg_buf[:, :HALO] = zero_halo
    avg_buf[:, HALO + HW:] = zero_halo
    max_buf[:, :HALO] = zero_halo
    max_buf[:, HALO + HW:] = zero_halo
    avg_buf[:, HALO:HALO + HW] = avg
    max_buf[:, HALO:HALO + HW] = m

    # ---- 7x7 conv as 49 lane-dense shifted MACs --------------------------------
    # Tap (ki, kj) needs pooled[h+ki-pad, w+kj-pad] = flat window at lane offset
    # (ki-pad)*W + (kj-pad).  Row overflow lands in the zero halo; column wrap is
    # zeroed by the border mask folded into wmask in the wrapper.
    acc = jnp.zeros((B, HW), jnp.float32)
    for t in range(KK):
        ki, kj = t // K, t % K
        start = HALO + (ki - pad) * W + (kj - pad)
        acc = acc + (avg_buf[:, start:start + HW] * wmask_ref[t:t + 1, :]
                     + max_buf[:, start:start + HW] * wmask_ref[KK + t:KK + t + 1, :])

    o_ref[:, 0, :] = jax.nn.sigmoid(acc).astype(o_ref.dtype)


def _pick_block_b(N, C, HW, in_itemsize, halo):
    """Images per grid step, sized against a conservative VMEM budget."""
    budget = 24 * 1024 * 1024            # stays under v7x's 32 MiB default scoped VMEM
    per_b = (2 * C * HW * in_itemsize    # double-buffered input block (dominant)
             + 2 * HW * 4                # double-buffered output block
             + 2 * (2 * halo + HW) * 4)  # the two padded scratch buffers
    cap = max(1, budget // per_b)
    cap = min(cap, 32)                   # bound per-tap vreg working set
    if N >= 2:
        cap = min(cap, max(1, N // 2))   # keep grid >= 2 (v7x megacore + pipelining)
    if cap >= 8:
        cap -= cap % 8                   # sublane-friendly block
    return max(1, min(cap, N))


def spatial_attention_pallas(x, wconv):
    """x: (N, C, H, W).  wconv: (2, K, K) -- torch conv1.weight squeezed from (1, 2, K, K)."""
    N, C, H, W = x.shape
    K = wconv.shape[-1]
    pad = (K - 1) // 2
    HW = H * W
    # 128-aligned halo, >= max |tap offset| = pad*W + pad  ->  aligned scratch stores.
    halo = ((pad * W + pad + 127) // 128) * 128

    # NCHW is already channel-major, so this reshape is free (no HBM transpose).
    x_flat = x.reshape(N, C, HW)

    # Fold the per-tap border-validity mask (flat-layout column/row wrap) into the
    # conv weights.  Tiny wrapper-side compute; gives a mask-free inner loop.
    p = np.arange(HW)
    hh, ww = p // W, p % W
    valid = np.empty((K, K, HW), np.float32)
    for ki in range(K):
        for kj in range(K):
            dy, dx = ki - pad, kj - pad
            valid[ki, kj] = ((hh + dy >= 0) & (hh + dy < H) &
                             (ww + dx >= 0) & (ww + dx < W)).astype(np.float32)
    valid = jnp.asarray(valid.reshape(K * K, HW))                   # (K*K, HW)
    w2 = wconv.reshape(2, K * K).astype(jnp.float32)                # [avg taps, max taps]
    wmask = (w2[:, :, None] * valid[None, :, :]).reshape(2 * K * K, HW)

    block_b = _pick_block_b(N, C, HW, x.dtype.itemsize, halo)
    grid = (pl.cdiv(N, block_b),)       # non-divisible N: last block is clamped

    kernel = functools.partial(_spatial_attention_kernel,
                               B=block_b, C=C, HW=HW, W=W, K=K, HALO=halo)

    out = pl.pallas_call(
        kernel,
        out_shape=jax.ShapeDtypeStruct((N, 1, HW), x.dtype),
        grid=grid,
        in_specs=[
            pl.BlockSpec((block_b, C, HW), lambda n: (n, 0, 0)),
            pl.BlockSpec((2 * K * K, HW), lambda n: (0, 0)),   # resident; fetched once
        ],
        out_specs=pl.BlockSpec((block_b, 1, HW), lambda n: (n, 0, 0)),
        scratch_shapes=[
            pltpu.VMEM((block_b, 2 * halo + HW), jnp.float32),
            pltpu.VMEM((block_b, 2 * halo + HW), jnp.float32),
        ],
        compiler_params=pltpu.CompilerParams(dimension_semantics=("parallel",)),
    )(x_flat, wmask)

    return out.reshape(N, 1, H, W)


def spatial_attention_ref(x, wconv):
    """Pure-JAX reference matching the PyTorch SpatialAttention forward."""
    avg = x.mean(axis=1, keepdims=True)
    mx = x.max(axis=1, keepdims=True)
    cat = jnp.concatenate([avg, mx], axis=1)                  # (N, 2, H, W)
    pad = (wconv.shape[-1] - 1) // 2
    conv = jax.lax.conv_general_dilated(
        cat, wconv[None], window_strides=(1, 1),
        padding=[(pad, pad), (pad, pad)],
        dimension_numbers=("NCHW", "OIHW", "NCHW"))
    return jax.nn.sigmoid(conv)


if __name__ == "__main__":
    key = jax.random.PRNGKey(0)
    k1, k2 = jax.random.split(key, 2)

    # SpatialAttention(kernel_size=7) on a small NCHW input.
    N, C, H, W = 2, 32, 16, 16
    K = 7

    x = jax.random.normal(k1, (N, C, H, W), jnp.float32)
    wconv = jax.random.normal(k2, (2, K, K), jnp.float32) * 0.1   # conv1.weight (squeezed)

    y = spatial_attention_pallas(x, wconv)
    jax.block_until_ready(y)

    y_ref = spatial_attention_ref(x, wconv)
    np.testing.assert_allclose(np.asarray(y), np.asarray(y_ref), rtol=1e-4, atol=1e-5)

    print("KERNEL_OK")
</pallas_src>

<mosaic_0001>
module attributes {stable_mosaic.version = 11 : i64} {
  func.func @_spatial_attention_kernel(%arg0: i32, %arg1: memref<1x32x256xf32, #tpu.memory_space<vmem>>, %arg2: memref<98x256xf32, #tpu.memory_space<vmem>>, %arg3: memref<1x1x256xf32, #tpu.memory_space<vmem>>, %arg4: memref<1x512xf32, #tpu.memory_space<vmem>>, %arg5: memref<1x512xf32, #tpu.memory_space<vmem>>) attributes {dimension_semantics = [#tpu.dimension_semantics<parallel>], iteration_bounds = array<i64: 2>, scalar_prefetch = 0 : i64, scratch_operands = 2 : i64, tpu.core_type = #tpu.core_type<tc>, window_params = [{transform_indices = @transform_0, window_bounds = array<i64: 1, 32, 256>}, {pipeline_mode = #tpu.pipeline_mode<synchronous>, transform_indices = @transform_1, window_bounds = array<i64: 98, 256>}, {transform_indices = @transform_2, window_bounds = array<i64: 1, 1, 256>}]} {
    %cst = arith.constant 0.000000e+00 : f32
    %0 = vector.broadcast %cst : f32 to vector<1x256xf32>
    %cst_0 = arith.constant 0xFF800000 : f32
    %1 = vector.broadcast %cst_0 : f32 to vector<1x256xf32>
    %c0_i32 = arith.constant 0 : i32
    %c8_i32 = arith.constant 8 : i32
    %2 = arith.muli %c0_i32, %c8_i32 : i32
    %3 = tpu.assume_multiple %2, 8 : i32
    %c0 = arith.constant 0 : index
    %4 = arith.index_cast %3 : i32 to index
    %c0_1 = arith.constant 0 : index
    %5 = vector.load %arg1[%c0, %4, %c0_1] : memref<1x32x256xf32, #tpu.memory_space<vmem>>, vector<1x8x256xf32>
    %cst_2 = arith.constant dense<0.000000e+00> : vector<1x256xf32>
    %6 = vector.multi_reduction <add>, %5, %cst_2 [1] : vector<1x8x256xf32> to vector<1x256xf32>
    %cst_3 = arith.constant dense<0xFF800000> : vector<1x256xf32>
    %7 = vector.multi_reduction <maximumf>, %5, %cst_3 [1] : vector<1x8x256xf32> to vector<1x256xf32>
    %8 = arith.addf %0, %6 : vector<1x256xf32>
    %9 = arith.maximumf %1, %7 : vector<1x256xf32>
    %c1_i32 = arith.constant 1 : i32
    %c8_i32_4 = arith.constant 8 : i32
    %10 = arith.muli %c1_i32, %c8_i32_4 : i32
    %11 = tpu.assume_multiple %10, 8 : i32
    %c0_5 = arith.constant 0 : index
    %12 = arith.index_cast %11 : i32 to index
    %c0_6 = arith.constant 0 : index
    %13 = vector.load %arg1[%c0_5, %12, %c0_6] : memref<1x32x256xf32, #tpu.memory_space<vmem>>, vector<1x8x256xf32>
    %cst_7 = arith.constant dense<0.000000e+00> : vector<1x256xf32>
    %14 = vector.multi_reduction <add>, %13, %cst_7 [1] : vector<1x8x256xf32> to vector<1x256xf32>
    %cst_8 = arith.constant dense<0xFF800000> : vector<1x256xf32>
    %15 = vector.multi_reduction <maximumf>, %13, %cst_8 [1] : vector<1x8x256xf32> to vector<1x256xf32>
    %16 = arith.addf %8, %14 : vector<1x256xf32>
    %17 = arith.maximumf %9, %15 : vector<1x256xf32>
    %c2_i32 = arith.constant 2 : i32
    %c8_i32_9 = arith.constant 8 : i32
    %18 = arith.muli %c2_i32, %c8_i32_9 : i32
    %19 = tpu.assume_multiple %18, 8 : i32
    %c0_10 = arith.constant 0 : index
    %20 = arith.index_cast %19 : i32 to index
    %c0_11 = arith.constant 0 : index
    %21 = vector.load %arg1[%c0_10, %20, %c0_11] : memref<1x32x256xf32, #tpu.memory_space<vmem>>, vector<1x8x256xf32>
    %cst_12 = arith.constant dense<0.000000e+00> : vector<1x256xf32>
    %22 = vector.multi_reduction <add>, %21, %cst_12 [1] : vector<1x8x256xf32> to vector<1x256xf32>
    %cst_13 = arith.constant dense<0xFF800000> : vector<1x256xf32>
    %23 = vector.multi_reduction <maximumf>, %21, %cst_13 [1] : vector<1x8x256xf32> to vector<1x256xf32>
    %24 = arith.addf %16, %22 : vector<1x256xf32>
    %25 = arith.maximumf %17, %23 : vector<1x256xf32>
    %c3_i32 = arith.constant 3 : i32
    %c8_i32_14 = arith.constant 8 : i32
    %26 = arith.muli %c3_i32, %c8_i32_14 : i32
    %27 = tpu.assume_multiple %26, 8 : i32
    %c0_15 = arith.constant 0 : index
    %28 = arith.index_cast %27 : i32 to index
    %c0_16 = arith.constant 0 : index
    %29 = vector.load %arg1[%c0_15, %28, %c0_16] : memref<1x32x256xf32, #tpu.memory_space<vmem>>, vector<1x8x256xf32>
    %cst_17 = arith.constant dense<0.000000e+00> : vector<1x256xf32>
    %30 = vector.multi_reduction <add>, %29, %cst_17 [1] : vector<1x8x256xf32> to vector<1x256xf32>
    %cst_18 = arith.constant dense<0xFF800000> : vector<1x256xf32>
    %31 = vector.multi_reduction <maximumf>, %29, %cst_18 [1] : vector<1x8x256xf32> to vector<1x256xf32>
    %32 = arith.addf %24, %30 : vector<1x256xf32>
    %33 = arith.maximumf %25, %31 : vector<1x256xf32>
    %c4_i32 = arith.constant 4 : i32
    %cst_19 = arith.constant 3.125000e-02 : f32
    %34 = vector.broadcast %cst_19 : f32 to vector<1x256xf32>
    %35 = arith.mulf %32, %34 : vector<1x256xf32>
    %cst_20 = arith.constant 0.000000e+00 : f32
    %36 = vector.broadcast %cst_20 : f32 to vector<1x128xf32>
    %c0_21 = arith.constant 0 : index
    %c0_22 = arith.constant 0 : index
    %37 = vector.load %arg4[%c0_21, %c0_22] : memref<1x512xf32, #tpu.memory_space<vmem>>, vector<1x128xf32>
    tpu.vector_store %arg4[%c0_21, %c0_22], %36 {strides = array<i32>} : memref<1x512xf32, #tpu.memory_space<vmem>>, vector<1x128xf32>,
    %c0_23 = arith.constant 0 : index
    %c384 = arith.constant 384 : index
    %38 = vector.load %arg4[%c0_23, %c384] : memref<1x512xf32, #tpu.memory_space<vmem>>, vector<1x128xf32>
    tpu.vector_store %arg4[%c0_23, %c384], %36 {strides = array<i32>} : memref<1x512xf32, #tpu.memory_space<vmem>>, vector<1x128xf32>,
    %c0_24 = arith.constant 0 : index
    %c0_25 = arith.constant 0 : index
    %39 = vector.load %arg5[%c0_24, %c0_25] : memref<1x512xf32, #tpu.memory_space<vmem>>, vector<1x128xf32>
    tpu.vector_store %arg5[%c0_24, %c0_25], %36 {strides = array<i32>} : memref<1x512xf32, #tpu.memory_space<vmem>>, vector<1x128xf32>,
    %c0_26 = arith.constant 0 : index
    %c384_27 = arith.constant 384 : index
    %40 = vector.load %arg5[%c0_26, %c384_27] : memref<1x512xf32, #tpu.memory_space<vmem>>, vector<1x128xf32>
    tpu.vector_store %arg5[%c0_26, %c384_27], %36 {strides = array<i32>} : memref<1x512xf32, #tpu.memory_space<vmem>>, vector<1x128xf32>,
    %c0_28 = arith.constant 0 : index
    %c128 = arith.constant 128 : index
    %41 = vector.load %arg4[%c0_28, %c128] : memref<1x512xf32, #tpu.memory_space<vmem>>, vector<1x256xf32>
    tpu.vector_store %arg4[%c0_28, %c128], %35 {strides = array<i32>} : memref<1x512xf32, #tpu.memory_space<vmem>>, vector<1x256xf32>,
    %c0_29 = arith.constant 0 : index
    %c128_30 = arith.constant 128 : index
    %42 = vector.load %arg5[%c0_29, %c128_30] : memref<1x512xf32, #tpu.memory_space<vmem>>, vector<1x256xf32>
    tpu.vector_store %arg5[%c0_29, %c128_30], %33 {strides = array<i32>} : memref<1x512xf32, #tpu.memory_space<vmem>>, vector<1x256xf32>,
    %cst_31 = arith.constant 0.000000e+00 : f32
    %43 = vector.broadcast %cst_31 : f32 to vector<1x256xf32>
    %c0_32 = arith.constant 0 : index
    %c77 = arith.constant 77 : index
    %44 = vector.load %arg4[%c0_32, %c77] : memref<1x512xf32, #tpu.memory_space<vmem>>, vector<1x256xf32>
    %c0_33 = arith.constant 0 : index
    %c0_34 = arith.constant 0 : index
    %45 = vector.load %arg2[%c0_33, %c0_34] : memref<98x256xf32, #tpu.memory_space<vmem>>, vector<1x256xf32>
    %46 = arith.mulf %44, %45 : vector<1x256xf32>
    %c0_35 = arith.constant 0 : index
    %c77_36 = arith.constant 77 : index
    %47 = vector.load %arg5[%c0_35, %c77_36] : memref<1x512xf32, #tpu.memory_space<vmem>>, vector<1x256xf32>
    %c49 = arith.constant 49 : index
    %c0_37 = arith.constant 0 : index
    %48 = vector.load %arg2[%c49, %c0_37] : memref<98x256xf32, #tpu.memory_space<vmem>>, vector<1x256xf32>
    %49 = arith.mulf %47, %48 : vector<1x256xf32>
    %50 = arith.addf %46, %49 : vector<1x256xf32>
    %51 = arith.addf %43, %50 : vector<1x256xf32>
    %c0_38 = arith.constant 0 : index
    %c78 = arith.constant 78 : index
    %52 = vector.load %arg4[%c0_38, %c78] : memref<1x512xf32, #tpu.memory_space<vmem>>, vector<1x256xf32>
    %c1 = arith.constant 1 : index
    %c0_39 = arith.constant 0 : index
    %53 = vector.load %arg2[%c1, %c0_39] : memref<98x256xf32, #tpu.memory_space<vmem>>, vector<1x256xf32>
    %54 = arith.mulf %52, %53 : vector<1x256xf32>
    %c0_40 = arith.constant 0 : index
    %c78_41 = arith.constant 78 : index
    %55 = vector.load %arg5[%c0_40, %c78_41] : memref<1x512xf32, #tpu.memory_space<vmem>>, vector<1x256xf32>
    %c50 = arith.constant 50 : index
    %c0_42 = arith.constant 0 : index
    %56 = vector.load %arg2[%c50, %c0_42] : memref<98x256xf32, #tpu.memory_space<vmem>>, vector<1x256xf32>
    %57 = arith.mulf %55, %56 : vector<1x256xf32>
    %58 = arith.addf %54, %57 : vector<1x256xf32>
    %59 = arith.addf %51, %58 : vector<1x256xf32>
    %c0_43 = arith.constant 0 : index
    %c79 = arith.constant 79 : index
    %60 = vector.load %arg4[%c0_43, %c79] : memref<1x512xf32, #tpu.memory_space<vmem>>, vector<1x256xf32>
    %c2 = arith.constant 2 : index
    %c0_44 = arith.constant 0 : index
    %61 = vector.load %arg2[%c2, %c0_44] : memref<98x256xf32, #tpu.memory_space<vmem>>, vector<1x256xf32>
    %62 = arith.mulf %60, %61 : vector<1x256xf32>
    %c0_45 = arith.constant 0 : index
    %c79_46 = arith.constant 79 : index
    %63 = vector.load %arg5[%c0_45, %c79_46] : memref<1x512xf32, #tpu.memory_space<vmem>>, vector<1x256xf32>
    %c51 = arith.constant 51 : index
    %c0_47 = arith.constant 0 : index
    %64 = vector.load %arg2[%c51, %c0_47] : memref<98x256xf32, #tpu.memory_space<vmem>>, vector<1x256xf32>
    %65 = arith.mulf %63, %64 : vector<1x256xf32>
    %66 = arith.addf %62, %65 : vector<1x256xf32>
    %67 = arith.addf %59, %66 : vector<1x256xf32>
    %c0_48 = arith.constant 0 : index
    %c80 = arith.constant 80 : index
    %68 = vector.load %arg4[%c0_48, %c80] : memref<1x512xf32, #tpu.memory_space<vmem>>, vector<1x256xf32>
    %c3 = arith.constant 3 : index
    %c0_49 = arith.constant 0 : index
    %69 = vector.load %arg2[%c3, %c0_49] : memref<98x256xf32, #tpu.memory_space<vmem>>, vector<1x256xf32>
    %70 = arith.mulf %68, %69 : vector<1x256xf32>
    %c0_50 = arith.constant 0 : index
    %c80_51 = arith.constant 80 : index
    %71 = vector.load %arg5[%c0_50, %c80_51] : memref<1x512xf32, #tpu.memory_space<vmem>>, vector<1x256xf32>
    %c52 = arith.constant 52 : index
    %c0_52 = arith.constant 0 : index
    %72 = vector.load %arg2[%c52, %c0_52] : memref<98x256xf32, #tpu.memory_space<vmem>>, vector<1x256xf32>
    %73 = arith.mulf %71, %72 : vector<1x256xf32>
    %74 = arith.addf %70, %73 : vector<1x256xf32>
    %75 = arith.addf %67, %74 : vector<1x256xf32>
    %c0_53 = arith.constant 0 : index
    %c81 = arith.constant 81 : index
    %76 = vector.load %arg4[%c0_53, %c81] : memref<1x512xf32, #tpu.memory_space<vmem>>, vector<1x256xf32>
    %c4 = arith.constant 4 : index
    %c0_54 = arith.constant 0 : index
    %77 = vector.load %arg2[%c4, %c0_54] : memref<98x256xf32, #tpu.memory_space<vmem>>, vector<1x256xf32>
    %78 = arith.mulf %76, %77 : vector<1x256xf32>
    %c0_55 = arith.constant 0 : index
    %c81_56 = arith.constant 81 : index
    %79 = vector.load %arg5[%c0_55, %c81_56] : memref<1x512xf32, #tpu.memory_space<vmem>>, vector<1x256xf32>
    %c53 = arith.constant 53 : index
    %c0_57 = arith.constant 0 : index
    %80 = vector.load %arg2[%c53, %c0_57] : memref<98x256xf32, #tpu.memory_space<vmem>>, vector<1x256xf32>
    %81 = arith.mulf %79, %80 : vector<1x256xf32>
    %82 = arith.addf %78, %81 : vector<1x256xf32>
    %83 = arith.addf %75, %82 : vector<1x256xf32>
    %c0_58 = arith.constant 0 : index
    %c82 = arith.constant 82 : index
    %84 = vector.load %arg4[%c0_58, %c82] : memref<1x512xf32, #tpu.memory_space<vmem>>, vector<1x256xf32>
    %c5 = arith.constant 5 : index
    %c0_59 = arith.constant 0 : index
    %85 = vector.load %arg2[%c5, %c0_59] : memref<98x256xf32, #tpu.memory_space<vmem>>, vector<1x256xf32>
    %86 = arith.mulf %84, %85 : vector<1x256xf32>
    %c0_60 = arith.constant 0 : index
    %c82_61 = arith.constant 82 : index
    %87 = vector.load %arg5[%c0_60, %c82_61] : memref<1x512xf32, #tpu.memory_space<vmem>>, vector<1x256xf32>
    %c54 = arith.constant 54 : index
    %c0_62 = arith.constant 0 : index
    %88 = vector.load %arg2[%c54, %c0_62] : memref<98x256xf32, #tpu.memory_space<vmem>>, vector<1x256xf32>
    %89 = arith.mulf %87, %88 : vector<1x256xf32>
    %90 = arith.addf %86, %89 : vector<1x256xf32>
    %91 = arith.addf %83, %90 : vector<1x256xf32>
    %c0_63 = arith.constant 0 : index
    %c83 = arith.constant 83 : index
    %92 = vector.load %arg4[%c0_63, %c83] : memref<1x512xf32, #tpu.memory_space<vmem>>, vector<1x256xf32>
    %c6 = arith.constant 6 : index
    %c0_64 = arith.constant 0 : index
    %93 = vector.load %arg2[%c6, %c0_64] : memref<98x256xf32, #tpu.memory_space<vmem>>, vector<1x256xf32>
    %94 = arith.mulf %92, %93 : vector<1x256xf32>
    %c0_65 = arith.constant 0 : index
    %c83_66 = arith.constant 83 : index
    %95 = vector.load %arg5[%c0_65, %c83_66] : memref<1x512xf32, #tpu.memory_space<vmem>>, vector<1x256xf32>
    %c55 = arith.constant 55 : index
    %c0_67 = arith.constant 0 : index
    %96 = vector.load %arg2[%c55, %c0_67] : memref<98x256xf32, #tpu.memory_space<vmem>>, vector<1x256xf32>
    %97 = arith.mulf %95, %96 : vector<1x256xf32>
    %98 = arith.addf %94, %97 : vector<1x256xf32>
    %99 = arith.addf %91, %98 : vector<1x256xf32>
    %c0_68 = arith.constant 0 : index
    %c93 = arith.constant 93 : index
    %100 = vector.load %arg4[%c0_68, %c93] : memref<1x512xf32, #tpu.memory_space<vmem>>, vector<1x256xf32>
    %c7 = arith.constant 7 : index
    %c0_69 = arith.constant 0 : index
    %101 = vector.load %arg2[%c7, %c0_69] : memref<98x256xf32, #tpu.memory_space<vmem>>, vector<1x256xf32>
    %102 = arith.mulf %100, %101 : vector<1x256xf32>
    %c0_70 = arith.constant 0 : index
    %c93_71 = arith.constant 93 : index
    %103 = vector.load %arg5[%c0_70, %c93_71] : memref<1x512xf32, #tpu.memory_space<vmem>>, vector<1x256xf32>
    %c56 = arith.constant 56 : index
    %c0_72 = arith.constant 0 : index
    %104 = vector.load %arg2[%c56, %c0_72] : memref<98x256xf32, #tpu.memory_space<vmem>>, vector<1x256xf32>
    %105 = arith.mulf %103, %104 : vector<1x256xf32>
    %106 = arith.addf %102, %105 : vector<1x256xf32>
    %107 = arith.addf %99, %106 : vector<1x256xf32>
    %c0_73 = arith.constant 0 : index
    %c94 = arith.constant 94 : index
    %108 = vector.load %arg4[%c0_73, %c94] : memref<1x512xf32, #tpu.memory_space<vmem>>, vector<1x256xf32>
    %c8 = arith.constant 8 : index
    %c0_74 = arith.constant 0 : index
    %109 = vector.load %arg2[%c8, %c0_74] : memref<98x256xf32, #tpu.memory_space<vmem>>, vector<1x256xf32>
    %110 = arith.mulf %108, %109 : vector<1x256xf32>
    %c0_75 = arith.constant 0 : index
    %c94_76 = arith.constant 94 : index
    %111 = vector.load %arg5[%c0_75, %c94_76] : memref<1x512xf32, #tpu.memory_space<vmem>>, vector<1x256xf32>
    %c57 = arith.constant 57 : index
    %c0_77 = arith.constant 0 : index
    %112 = vector.load %arg2[%c57, %c0_77] : memref<98x256xf32, #tpu.memory_space<vmem>>, vector<1x256xf32>
    %113 = arith.mulf %111, %112 : vector<1x256xf32>
    %114 = arith.addf %110, %113 : vector<1x256xf32>
    %115 = arith.addf %107, %114 : vector<1x256xf32>
    %c0_78 = arith.constant 0 : index
    %c95 = arith.constant 95 : index
    %116 = vector.load %arg4[%c0_78, %c95] : memref<1x512xf32, #tpu.memory_space<vmem>>, vector<1x256xf32>
    %c9 = arith.constant 9 : index
    %c0_79 = arith.constant 0 : index
    %117 = vector.load %arg2[%c9, %c0_79] : memref<98x256xf32, #tpu.memory_space<vmem>>, vector<1x256xf32>
    %118 = arith.mulf %116, %117 : vector<1x256xf32>
    %c0_80 = arith.constant 0 : index
    %c95_81 = arith.constant 95 : index
    %119 = vector.load %arg5[%c0_80, %c95_81] : memref<1x512xf32, #tpu.memory_space<vmem>>, vector<1x256xf32>
    %c58 = arith.constant 58 : index
    %c0_82 = arith.constant 0 : index
    %120 = vector.load %arg2[%c58, %c0_82] : memref<98x256xf32, #tpu.memory_space<vmem>>, vector<1x256xf32>
    %121 = arith.mulf %119, %120 : vector<1x256xf32>
    %122 = arith.addf %118, %121 : vector<1x256xf32>
    %123 = arith.addf %115, %122 : vector<1x256xf32>
    %c0_83 = arith.constant 0 : index
    %c96 = arith.constant 96 : index
    %124 = vector.load %arg4[%c0_83, %c96] : memref<1x512xf32, #tpu.memory_space<vmem>>, vector<1x256xf32>
    %c10 = arith.constant 10 : index
    %c0_84 = arith.constant 0 : index
    %125 = vector.load %arg2[%c10, %c0_84] : memref<98x256xf32, #tpu.memory_space<vmem>>, vector<1x256xf32>
    %126 = arith.mulf %124, %125 : vector<1x256xf32>
    %c0_85 = arith.constant 0 : index
    %c96_86 = arith.constant 96 : index
    %127 = vector.load %arg5[%c0_85, %c96_86] : memref<1x512xf32, #tpu.memory_space<vmem>>, vector<1x256xf32>
    %c59 = arith.constant 59 : index
    %c0_87 = arith.constant 0 : index
    %128 = vector.load %arg2[%c59, %c0_87] : memref<98x256xf32, #tpu.memory_space<vmem>>, vector<1x256xf32>
    %129 = arith.mulf %127, %128 : vector<1x256xf32>
    %130 = arith.addf %126, %129 : vector<1x256xf32>
    %131 = arith.addf %123, %130 : vector<1x256xf32>
    %c0_88 = arith.constant 0 : index
    %c97 = arith.constant 97 : index
    %132 = vector.load %arg4[%c0_88, %c97] : memref<1x512xf32, #tpu.memory_space<vmem>>, vector<1x256xf32>
    %c11 = arith.constant 11 : index
    %c0_89 = arith.constant 0 : index
    %133 = vector.load %arg2[%c11, %c0_89] : memref<98x256xf32, #tpu.memory_space<vmem>>, vector<1x256xf32>
    %134 = arith.mulf %132, %133 : vector<1x256xf32>
    %c0_90 = arith.constant 0 : index
    %c97_91 = arith.constant 97 : index
    %135 = vector.load %arg5[%c0_90, %c97_91] : memref<1x512xf32, #tpu.memory_space<vmem>>, vector<1x256xf32>
    %c60 = arith.constant 60 : index
    %c0_92 = arith.constant 0 : index
    %136 = vector.load %arg2[%c60, %c0_92] : memref<98x256xf32, #tpu.memory_space<vmem>>, vector<1x256xf32>
    %137 = arith.mulf %135, %136 : vector<1x256xf32>
    %138 = arith.addf %134, %137 : vector<1x256xf32>
    %139 = arith.addf %131, %138 : vector<1x256xf32>
    %c0_93 = arith.constant 0 : index
    %c98 = arith.constant 98 : index
    %140 = vector.load %arg4[%c0_93, %c98] : memref<1x512xf32, #tpu.memory_space<vmem>>, vector<1x256xf32>
    %c12 = arith.constant 12 : index
    %c0_94 = arith.constant 0 : index
    %141 = vector.load %arg2[%c12, %c0_94] : memref<98x256xf32, #tpu.memory_space<vmem>>, vector<1x256xf32>
    %142 = arith.mulf %140, %141 : vector<1x256xf32>
    %c0_95 = arith.constant 0 : index
    %c98_96 = arith.constant 98 : index
    %143 = vector.load %arg5[%c0_95, %c98_96] : memref<1x512xf32, #tpu.memory_space<vmem>>, vector<1x256xf32>
    %c61 = arith.constant 61 : index
    %c0_97 = arith.constant 0 : index
    %144 = vector.load %arg2[%c61, %c0_97] : memref<98x256xf32, #tpu.memory_space<vmem>>, vector<1x256xf32>
    %145 = arith.mulf %143, %144 : vector<1x256xf32>
    %146 = arith.addf %142, %145 : vector<1x256xf32>
    %147 = arith.addf %139, %146 : vector<1x256xf32>
    %c0_98 = arith.constant 0 : index
    %c99 = arith.constant 99 : index
    %148 = vector.load %arg4[%c0_98, %c99] : memref<1x512xf32, #tpu.memory_space<vmem>>, vector<1x256xf32>
    %c13 = arith.constant 13 : index
    %c0_99 = arith.constant 0 : index
    %149 = vector.load %arg2[%c13, %c0_99] : memref<98x256xf32, #tpu.memory_space<vmem>>, vector<1x256xf32>
    %150 = arith.mulf %148, %149 : vector<1x256xf32>
    %c0_100 = arith.constant 0 : index
    %c99_101 = arith.constant 99 : index
    %151 = vector.load %arg5[%c0_100, %c99_101] : memref<1x512xf32, #tpu.memory_space<vmem>>, vector<1x256xf32>
    %c62 = arith.constant 62 : index
    %c0_102 = arith.constant 0 : index
    %152 = vector.load %arg2[%c62, %c0_102] : memref<98x256xf32, #tpu.memory_space<vmem>>, vector<1x256xf32>
    %153 = arith.mulf %151, %152 : vector<1x256xf32>
    %154 = arith.addf %150, %153 : vector<1x256xf32>
    %155 = arith.addf %147, %154 : vector<1x256xf32>
    %c0_103 = arith.constant 0 : index
    %c109 = arith.constant 109 : index
    %156 = vector.load %arg4[%c0_103, %c109] : memref<1x512xf32, #tpu.memory_space<vmem>>, vector<1x256xf32>
    %c14 = arith.constant 14 : index
    %c0_104 = arith.constant 0 : index
    %157 = vector.load %arg2[%c14, %c0_104] : memref<98x256xf32, #tpu.memory_space<vmem>>, vector<1x256xf32>
    %158 = arith.mulf %156, %157 : vector<1x256xf32>
    %c0_105 = arith.constant 0 : index
    %c109_106 = arith.constant 109 : index
    %159 = vector.load %arg5[%c0_105, %c109_106] : memref<1x512xf32, #tpu.memory_space<vmem>>, vector<1x256xf32>
    %c63 = arith.constant 63 : index
    %c0_107 = arith.constant 0 : index
    %160 = vector.load %arg2[%c63, %c0_107] : memref<98x256xf32, #tpu.memory_space<vmem>>, vector<1x256xf32>
    %161 = arith.mulf %159, %160 : vector<1x256xf32>
    %162 = arith.addf %158, %161 : vector<1x256xf32>
    %163 = arith.addf %155, %162 : vector<1x256xf32>
    %c0_108 = arith.constant 0 : index
    %c110 = arith.constant 110 : index
    %164 = vector.load %arg4[%c0_108, %c110] : memref<1x512xf32, #tpu.memory_space<vmem>>, vector<1x256xf32>
    %c15 = arith.constant 15 : index
    %c0_109 = arith.constant 0 : index
    %165 = vector.load %arg2[%c15, %c0_109] : memref<98x256xf32, #tpu.memory_space<vmem>>, vector<1x256xf32>
    %166 = arith.mulf %164, %165 : vector<1x256xf32>
    %c0_110 = arith.constant 0 : index
    %c110_111 = arith.constant 110 : index
    %167 = vector.load %arg5[%c0_110, %c110_111] : memref<1x512xf32, #tpu.memory_space<vmem>>, vector<1x256xf32>
    %c64 = arith.constant 64 : index
    %c0_112 = arith.constant 0 : index
    %168 = vector.load %arg2[%c64, %c0_112] : memref<98x256xf32, #tpu.memory_space<vmem>>, vector<1x256xf32>
    %169 = arith.mulf %167, %168 : vector<1x256xf32>
    %170 = arith.addf %166, %169 : vector<1x256xf32>
    %171 = arith.addf %163, %170 : vector<1x256xf32>
    %c0_113 = arith.constant 0 : index
    %c111 = arith.constant 111 : index
    %172 = vector.load %arg4[%c0_113, %c111] : memref<1x512xf32, #tpu.memory_space<vmem>>, vector<1x256xf32>
    %c16 = arith.constant 16 : index
    %c0_114 = arith.constant 0 : index
    %173 = vector.load %arg2[%c16, %c0_114] : memref<98x256xf32, #tpu.memory_space<vmem>>, vector<1x256xf32>
    %174 = arith.mulf %172, %173 : vector<1x256xf32>
    %c0_115 = arith.constant 0 : index
    %c111_116 = arith.constant 111 : index
    %175 = vector.load %arg5[%c0_115, %c111_116] : memref<1x512xf32, #tpu.memory_space<vmem>>, vector<1x256xf32>
    %c65 = arith.constant 65 : index
    %c0_117 = arith.constant 0 : index
    %176 = vector.load %arg2[%c65, %c0_117] : memref<98x256xf32, #tpu.memory_space<vmem>>, vector<1x256xf32>
    %177 = arith.mulf %175, %176 : vector<1x256xf32>
    %178 = arith.addf %174, %177 : vector<1x256xf32>
    %179 = arith.addf %171, %178 : vector<1x256xf32>
    %c0_118 = arith.constant 0 : index
    %c112 = arith.constant 112 : index
    %180 = vector.load %arg4[%c0_118, %c112] : memref<1x512xf32, #tpu.memory_space<vmem>>, vector<1x256xf32>
    %c17 = arith.constant 17 : index
    %c0_119 = arith.constant 0 : index
    %181 = vector.load %arg2[%c17, %c0_119] : memref<98x256xf32, #tpu.memory_space<vmem>>, vector<1x256xf32>
    %182 = arith.mulf %180, %181 : vector<1x256xf32>
    %c0_120 = arith.constant 0 : index
    %c112_121 = arith.constant 112 : index
    %183 = vector.load %arg5[%c0_120, %c112_121] : memref<1x512xf32, #tpu.memory_space<vmem>>, vector<1x256xf32>
    %c66 = arith.constant 66 : index
    %c0_122 = arith.constant 0 : index
    %184 = vector.load %arg2[%c66, %c0_122] : memref<98x256xf32, #tpu.memory_space<vmem>>, vector<1x256xf32>
    %185 = arith.mulf %183, %184 : vector<1x256xf32>
    %186 = arith.addf %182, %185 : vector<1x256xf32>
    %187 = arith.addf %179, %186 : vector<1x256xf32>
    %c0_123 = arith.constant 0 : index
    %c113 = arith.constant 113 : index
    %188 = vector.load %arg4[%c0_123, %c113] : memref<1x512xf32, #tpu.memory_space<vmem>>, vector<1x256xf32>
    %c18 = arith.constant 18 : index
    %c0_124 = arith.constant 0 : index
    %189 = vector.load %arg2[%c18, %c0_124] : memref<98x256xf32, #tpu.memory_space<vmem>>, vector<1x256xf32>
    %190 = arith.mulf %188, %189 : vector<1x256xf32>
    %c0_125 = arith.constant 0 : index
    %c113_126 = arith.constant 113 : index
    %191 = vector.load %arg5[%c0_125, %c113_126] : memref<1x512xf32, #tpu.memory_space<vmem>>, vector<1x256xf32>
    %c67 = arith.constant 67 : index
    %c0_127 = arith.constant 0 : index
    %192 = vector.load %arg2[%c67, %c0_127] : memref<98x256xf32, #tpu.memory_space<vmem>>, vector<1x256xf32>
    %193 = arith.mulf %191, %192 : vector<1x256xf32>
    %194 = arith.addf %190, %193 : vector<1x256xf32>
    %195 = arith.addf %187, %194 : vector<1x256xf32>
    %c0_128 = arith.constant 0 : index
    %c114 = arith.constant 114 : index
    %196 = vector.load %arg4[%c0_128, %c114] : memref<1x512xf32, #tpu.memory_space<vmem>>, vector<1x256xf32>
    %c19 = arith.constant 19 : index
    %c0_129 = arith.constant 0 : index
    %197 = vector.load %arg2[%c19, %c0_129] : memref<98x256xf32, #tpu.memory_space<vmem>>, vector<1x256xf32>
    %198 = arith.mulf %196, %197 : vector<1x256xf32>
    %c0_130 = arith.constant 0 : index
    %c114_131 = arith.constant 114 : index
    %199 = vector.load %arg5[%c0_130, %c114_131] : memref<1x512xf32, #tpu.memory_space<vmem>>, vector<1x256xf32>
    %c68 = arith.constant 68 : index
    %c0_132 = arith.constant 0 : index
    %200 = vector.load %arg2[%c68, %c0_132] : memref<98x256xf32, #tpu.memory_space<vmem>>, vector<1x256xf32>
    %201 = arith.mulf %199, %200 : vector<1x256xf32>
    %202 = arith.addf %198, %201 : vector<1x256xf32>
    %203 = arith.addf %195, %202 : vector<1x256xf32>
    %c0_133 = arith.constant 0 : index
    %c115 = arith.constant 115 : index
    %204 = vector.load %arg4[%c0_133, %c115] : memref<1x512xf32, #tpu.memory_space<vmem>>, vector<1x256xf32>
    %c20 = arith.constant 20 : index
    %c0_134 = arith.constant 0 : index
    %205 = vector.load %arg2[%c20, %c0_134] : memref<98x256xf32, #tpu.memory_space<vmem>>, vector<1x256xf32>
    %206 = arith.mulf %204, %205 : vector<1x256xf32>
    %c0_135 = arith.constant 0 : index
    %c115_136 = arith.constant 115 : index
    %207 = vector.load %arg5[%c0_135, %c115_136] : memref<1x512xf32, #tpu.memory_space<vmem>>, vector<1x256xf32>
    %c69 = arith.constant 69 : index
    %c0_137 = arith.constant 0 : index
    %208 = vector.load %arg2[%c69, %c0_137] : memref<98x256xf32, #tpu.memory_space<vmem>>, vector<1x256xf32>
    %209 = arith.mulf %207, %208 : vector<1x256xf32>
    %210 = arith.addf %206, %209 : vector<1x256xf32>
    %211 = arith.addf %203, %210 : vector<1x256xf32>
    %c0_138 = arith.constant 0 : index
    %c125 = arith.constant 125 : index
    %212 = vector.load %arg4[%c0_138, %c125] : memref<1x512xf32, #tpu.memory_space<vmem>>, vector<1x256xf32>
    %c21 = arith.constant 21 : index
    %c0_139 = arith.constant 0 : index
    %213 = vector.load %arg2[%c21, %c0_139] : memref<98x256xf32, #tpu.memory_space<vmem>>, vector<1x256xf32>
    %214 = arith.mulf %212, %213 : vector<1x256xf32>
    %c0_140 = arith.constant 0 : index
    %c125_141 = arith.constant 125 : index
    %215 = vector.load %arg5[%c0_140, %c125_141] : memref<1x512xf32, #tpu.memory_space<vmem>>, vector<1x256xf32>
    %c70 = arith.constant 70 : index
    %c0_142 = arith.constant 0 : index
    %216 = vector.load %arg2[%c70, %c0_142] : memref<98x256xf32, #tpu.memory_space<vmem>>, vector<1x256xf32>
    %217 = arith.mulf %215, %216 : vector<1x256xf32>
    %218 = arith.addf %214, %217 : vector<1x256xf32>
    %219 = arith.addf %211, %218 : vector<1x256xf32>
    %c0_143 = arith.constant 0 : index
    %c126 = arith.constant 126 : index
    %220 = vector.load %arg4[%c0_143, %c126] : memref<1x512xf32, #tpu.memory_space<vmem>>, vector<1x256xf32>
    %c22 = arith.constant 22 : index
    %c0_144 = arith.constant 0 : index
    %221 = vector.load %arg2[%c22, %c0_144] : memref<98x256xf32, #tpu.memory_space<vmem>>, vector<1x256xf32>
    %222 = arith.mulf %220, %221 : vector<1x256xf32>
    %c0_145 = arith.constant 0 : index
    %c126_146 = arith.constant 126 : index
    %223 = vector.load %arg5[%c0_145, %c126_146] : memref<1x512xf32, #tpu.memory_space<vmem>>, vector<1x256xf32>
    %c71 = arith.constant 71 : index
    %c0_147 = arith.constant 0 : index
    %224 = vector.load %arg2[%c71, %c0_147] : memref<98x256xf32, #tpu.memory_space<vmem>>, vector<1x256xf32>
    %225 = arith.mulf %223, %224 : vector<1x256xf32>
    %226 = arith.addf %222, %225 : vector<1x256xf32>
    %227 = arith.addf %219, %226 : vector<1x256xf32>
    %c0_148 = arith.constant 0 : index
    %c127 = arith.constant 127 : index
    %228 = vector.load %arg4[%c0_148, %c127] : memref<1x512xf32, #tpu.memory_space<vmem>>, vector<1x256xf32>
    %c23 = arith.constant 23 : index
    %c0_149 = arith.constant 0 : index
    %229 = vector.load %arg2[%c23, %c0_149] : memref<98x256xf32, #tpu.memory_space<vmem>>, vector<1x256xf32>
    %230 = arith.mulf %228, %229 : vector<1x256xf32>
    %c0_150 = arith.constant 0 : index
    %c127_151 = arith.constant 127 : index
    %231 = vector.load %arg5[%c0_150, %c127_151] : memref<1x512xf32, #tpu.memory_space<vmem>>, vector<1x256xf32>
    %c72 = arith.constant 72 : index
    %c0_152 = arith.constant 0 : index
    %232 = vector.load %arg2[%c72, %c0_152] : memref<98x256xf32, #tpu.memory_space<vmem>>, vector<1x256xf32>
    %233 = arith.mulf %231, %232 : vector<1x256xf32>
    %234 = arith.addf %230, %233 : vector<1x256xf32>
    %235 = arith.addf %227, %234 : vector<1x256xf32>
    %c0_153 = arith.constant 0 : index
    %c128_154 = arith.constant 128 : index
    %236 = vector.load %arg4[%c0_153, %c128_154] : memref<1x512xf32, #tpu.memory_space<vmem>>, vector<1x256xf32>
    %c24 = arith.constant 24 : index
    %c0_155 = arith.constant 0 : index
    %237 = vector.load %arg2[%c24, %c0_155] : memref<98x256xf32, #tpu.memory_space<vmem>>, vector<1x256xf32>
    %238 = arith.mulf %236, %237 : vector<1x256xf32>
    %c0_156 = arith.constant 0 : index
    %c128_157 = arith.constant 128 : index
    %239 = vector.load %arg5[%c0_156, %c128_157] : memref<1x512xf32, #tpu.memory_space<vmem>>, vector<1x256xf32>
    %c73 = arith.constant 73 : index
    %c0_158 = arith.constant 0 : index
    %240 = vector.load %arg2[%c73, %c0_158] : memref<98x256xf32, #tpu.memory_space<vmem>>, vector<1x256xf32>
    %241 = arith.mulf %239, %240 : vector<1x256xf32>
    %242 = arith.addf %238, %241 : vector<1x256xf32>
    %243 = arith.addf %235, %242 : vector<1x256xf32>
    %c0_159 = arith.constant 0 : index
    %c129 = arith.constant 129 : index
    %244 = vector.load %arg4[%c0_159, %c129] : memref<1x512xf32, #tpu.memory_space<vmem>>, vector<1x256xf32>
    %c25 = arith.constant 25 : index
    %c0_160 = arith.constant 0 : index
    %245 = vector.load %arg2[%c25, %c0_160] : memref<98x256xf32, #tpu.memory_space<vmem>>, vector<1x256xf32>
    %246 = arith.mulf %244, %245 : vector<1x256xf32>
    %c0_161 = arith.constant 0 : index
    %c129_162 = arith.constant 129 : index
    %247 = vector.load %arg5[%c0_161, %c129_162] : memref<1x512xf32, #tpu.memory_space<vmem>>, vector<1x256xf32>
    %c74 = arith.constant 74 : index
    %c0_163 = arith.constant 0 : index
    %248 = vector.load %arg2[%c74, %c0_163] : memref<98x256xf32, #tpu.memory_space<vmem>>, vector<1x256xf32>
    %249 = arith.mulf %247, %248 : vector<1x256xf32>
    %250 = arith.addf %246, %249 : vector<1x256xf32>
    %251 = arith.addf %243, %250 : vector<1x256xf32>
    %c0_164 = arith.constant 0 : index
    %c130 = arith.constant 130 : index
    %252 = vector.load %arg4[%c0_164, %c130] : memref<1x512xf32, #tpu.memory_space<vmem>>, vector<1x256xf32>
    %c26 = arith.constant 26 : index
    %c0_165 = arith.constant 0 : index
    %253 = vector.load %arg2[%c26, %c0_165] : memref<98x256xf32, #tpu.memory_space<vmem>>, vector<1x256xf32>
    %254 = arith.mulf %252, %253 : vector<1x256xf32>
    %c0_166 = arith.constant 0 : index
    %c130_167 = arith.constant 130 : index
    %255 = vector.load %arg5[%c0_166, %c130_167] : memref<1x512xf32, #tpu.memory_space<vmem>>, vector<1x256xf32>
    %c75 = arith.constant 75 : index
    %c0_168 = arith.constant 0 : index
    %256 = vector.load %arg2[%c75, %c0_168] : memref<98x256xf32, #tpu.memory_space<vmem>>, vector<1x256xf32>
    %257 = arith.mulf %255, %256 : vector<1x256xf32>
    %258 = arith.addf %254, %257 : vector<1x256xf32>
    %259 = arith.addf %251, %258 : vector<1x256xf32>
    %c0_169 = arith.constant 0 : index
    %c131 = arith.constant 131 : index
    %260 = vector.load %arg4[%c0_169, %c131] : memref<1x512xf32, #tpu.memory_space<vmem>>, vector<1x256xf32>
    %c27 = arith.constant 27 : index
    %c0_170 = arith.constant 0 : index
    %261 = vector.load %arg2[%c27, %c0_170] : memref<98x256xf32, #tpu.memory_space<vmem>>, vector<1x256xf32>
    %262 = arith.mulf %260, %261 : vector<1x256xf32>
    %c0_171 = arith.constant 0 : index
    %c131_172 = arith.constant 131 : index
    %263 = vector.load %arg5[%c0_171, %c131_172] : memref<1x512xf32, #tpu.memory_space<vmem>>, vector<1x256xf32>
    %c76 = arith.constant 76 : index
    %c0_173 = arith.constant 0 : index
    %264 = vector.load %arg2[%c76, %c0_173] : memref<98x256xf32, #tpu.memory_space<vmem>>, vector<1x256xf32>
    %265 = arith.mulf %263, %264 : vector<1x256xf32>
    %266 = arith.addf %262, %265 : vector<1x256xf32>
    %267 = arith.addf %259, %266 : vector<1x256xf32>
    %c0_174 = arith.constant 0 : index
    %c141 = arith.constant 141 : index
    %268 = vector.load %arg4[%c0_174, %c141] : memref<1x512xf32, #tpu.memory_space<vmem>>, vector<1x256xf32>
    %c28 = arith.constant 28 : index
    %c0_175 = arith.constant 0 : index
    %269 = vector.load %arg2[%c28, %c0_175] : memref<98x256xf32, #tpu.memory_space<vmem>>, vector<1x256xf32>
    %270 = arith.mulf %268, %269 : vector<1x256xf32>
    %c0_176 = arith.constant 0 : index
    %c141_177 = arith.constant 141 : index
    %271 = vector.load %arg5[%c0_176, %c141_177] : memref<1x512xf32, #tpu.memory_space<vmem>>, vector<1x256xf32>
    %c77_178 = arith.constant 77 : index
    %c0_179 = arith.constant 0 : index
    %272 = vector.load %arg2[%c77_178, %c0_179] : memref<98x256xf32, #tpu.memory_space<vmem>>, vector<1x256xf32>
    %273 = arith.mulf %271, %272 : vector<1x256xf32>
    %274 = arith.addf %270, %273 : vector<1x256xf32>
    %275 = arith.addf %267, %274 : vector<1x256xf32>
    %c0_180 = arith.constant 0 : index
    %c142 = arith.constant 142 : index
    %276 = vector.load %arg4[%c0_180, %c142] : memref<1x512xf32, #tpu.memory_space<vmem>>, vector<1x256xf32>
    %c29 = arith.constant 29 : index
    %c0_181 = arith.constant 0 : index
    %277 = vector.load %arg2[%c29, %c0_181] : memref<98x256xf32, #tpu.memory_space<vmem>>, vector<1x256xf32>
    %278 = arith.mulf %276, %277 : vector<1x256xf32>
    %c0_182 = arith.constant 0 : index
    %c142_183 = arith.constant 142 : index
    %279 = vector.load %arg5[%c0_182, %c142_183] : memref<1x512xf32, #tpu.memory_space<vmem>>, vector<1x256xf32>
    %c78_184 = arith.constant 78 : index
    %c0_185 = arith.constant 0 : index
    %280 = vector.load %arg2[%c78_184, %c0_185] : memref<98x256xf32, #tpu.memory_space<vmem>>, vector<1x256xf32>
    %281 = arith.mulf %279, %280 : vector<1x256xf32>
    %282 = arith.addf %278, %281 : vector<1x256xf32>
    %283 = arith.addf %275, %282 : vector<1x256xf32>
    %c0_186 = arith.constant 0 : index
    %c143 = arith.constant 143 : index
    %284 = vector.load %arg4[%c0_186, %c143] : memref<1x512xf32, #tpu.memory_space<vmem>>, vector<1x256xf32>
    %c30 = arith.constant 30 : index
    %c0_187 = arith.constant 0 : index
    %285 = vector.load %arg2[%c30, %c0_187] : memref<98x256xf32, #tpu.memory_space<vmem>>, vector<1x256xf32>
    %286 = arith.mulf %284, %285 : vector<1x256xf32>
    %c0_188 = arith.constant 0 : index
    %c143_189 = arith.constant 143 : index
    %287 = vector.load %arg5[%c0_188, %c143_189] : memref<1x512xf32, #tpu.memory_space<vmem>>, vector<1x256xf32>
    %c79_190 = arith.constant 79 : index
    %c0_191 = arith.constant 0 : index
    %288 = vector.load %arg2[%c79_190, %c0_191] : memref<98x256xf32, #tpu.memory_space<vmem>>, vector<1x256xf32>
    %289 = arith.mulf %287, %288 : vector<1x256xf32>
    %290 = arith.addf %286, %289 : vector<1x256xf32>
    %291 = arith.addf %283, %290 : vector<1x256xf32>
    %c0_192 = arith.constant 0 : index
    %c144 = arith.constant 144 : index
    %292 = vector.load %arg4[%c0_192, %c144] : memref<1x512xf32, #tpu.memory_space<vmem>>, vector<1x256xf32>
    %c31 = arith.constant 31 : index
    %c0_193 = arith.constant 0 : index
    %293 = vector.load %arg2[%c31, %c0_193] : memref<98x256xf32, #tpu.memory_space<vmem>>, vector<1x256xf32>
    %294 = arith.mulf %292, %293 : vector<1x256xf32>
    %c0_194 = arith.constant 0 : index
    %c144_195 = arith.constant 144 : index
    %295 = vector.load %arg5[%c0_194, %c144_195] : memref<1x512xf32, #tpu.memory_space<vmem>>, vector<1x256xf32>
    %c80_196 = arith.constant 80 : index
    %c0_197 = arith.constant 0 : index
    %296 = vector.load %arg2[%c80_196, %c0_197] : memref<98x256xf32, #tpu.memory_space<vmem>>, vector<1x256xf32>
    %297 = arith.mulf %295, %296 : vector<1x256xf32>
    %298 = arith.addf %294, %297 : vector<1x256xf32>
    %299 = arith.addf %291, %298 : vector<1x256xf32>
    %c0_198 = arith.constant 0 : index
    %c145 = arith.constant 145 : index
    %300 = vector.load %arg4[%c0_198, %c145] : memref<1x512xf32, #tpu.memory_space<vmem>>, vector<1x256xf32>
    %c32 = arith.constant 32 : index
    %c0_199 = arith.constant 0 : index
    %301 = vector.load %arg2[%c32, %c0_199] : memref<98x256xf32, #tpu.memory_space<vmem>>, vector<1x256xf32>
    %302 = arith.mulf %300, %301 : vector<1x256xf32>
    %c0_200 = arith.constant 0 : index
    %c145_201 = arith.constant 145 : index
    %303 = vector.load %arg5[%c0_200, %c145_201] : memref<1x512xf32, #tpu.memory_space<vmem>>, vector<1x256xf32>
    %c81_202 = arith.constant 81 : index
    %c0_203 = arith.constant 0 : index
    %304 = vector.load %arg2[%c81_202, %c0_203] : memref<98x256xf32, #tpu.memory_space<vmem>>, vector<1x256xf32>
    %305 = arith.mulf %303, %304 : vector<1x256xf32>
    %306 = arith.addf %302, %305 : vector<1x256xf32>
    %307 = arith.addf %299, %306 : vector<1x256xf32>
    %c0_204 = arith.constant 0 : index
    %c146 = arith.constant 146 : index
    %308 = vector.load %arg4[%c0_204, %c146] : memref<1x512xf32, #tpu.memory_space<vmem>>, vector<1x256xf32>
    %c33 = arith.constant 33 : index
    %c0_205 = arith.constant 0 : index
    %309 = vector.load %arg2[%c33, %c0_205] : memref<98x256xf32, #tpu.memory_space<vmem>>, vector<1x256xf32>
    %310 = arith.mulf %308, %309 : vector<1x256xf32>
    %c0_206 = arith.constant 0 : index
    %c146_207 = arith.constant 146 : index
    %311 = vector.load %arg5[%c0_206, %c146_207] : memref<1x512xf32, #tpu.memory_space<vmem>>, vector<1x256xf32>
    %c82_208 = arith.constant 82 : index
    %c0_209 = arith.constant 0 : index
    %312 = vector.load %arg2[%c82_208, %c0_209] : memref<98x256xf32, #tpu.memory_space<vmem>>, vector<1x256xf32>
    %313 = arith.mulf %311, %312 : vector<1x256xf32>
    %314 = arith.addf %310, %313 : vector<1x256xf32>
    %315 = arith.addf %307, %314 : vector<1x256xf32>
    %c0_210 = arith.constant 0 : index
    %c147 = arith.constant 147 : index
    %316 = vector.load %arg4[%c0_210, %c147] : memref<1x512xf32, #tpu.memory_space<vmem>>, vector<1x256xf32>
    %c34 = arith.constant 34 : index
    %c0_211 = arith.constant 0 : index
    %317 = vector.load %arg2[%c34, %c0_211] : memref<98x256xf32, #tpu.memory_space<vmem>>, vector<1x256xf32>
    %318 = arith.mulf %316, %317 : vector<1x256xf32>
    %c0_212 = arith.constant 0 : index
    %c147_213 = arith.constant 147 : index
    %319 = vector.load %arg5[%c0_212, %c147_213] : memref<1x512xf32, #tpu.memory_space<vmem>>, vector<1x256xf32>
    %c83_214 = arith.constant 83 : index
    %c0_215 = arith.constant 0 : index
    %320 = vector.load %arg2[%c83_214, %c0_215] : memref<98x256xf32, #tpu.memory_space<vmem>>, vector<1x256xf32>
    %321 = arith.mulf %319, %320 : vector<1x256xf32>
    %322 = arith.addf %318, %321 : vector<1x256xf32>
    %323 = arith.addf %315, %322 : vector<1x256xf32>
    %c0_216 = arith.constant 0 : index
    %c157 = arith.constant 157 : index
    %324 = vector.load %arg4[%c0_216, %c157] : memref<1x512xf32, #tpu.memory_space<vmem>>, vector<1x256xf32>
    %c35 = arith.constant 35 : index
    %c0_217 = arith.constant 0 : index
    %325 = vector.load %arg2[%c35, %c0_217] : memref<98x256xf32, #tpu.memory_space<vmem>>, vector<1x256xf32>
    %326 = arith.mulf %324, %325 : vector<1x256xf32>
    %c0_218 = arith.constant 0 : index
    %c157_219 = arith.constant 157 : index
    %327 = vector.load %arg5[%c0_218, %c157_219] : memref<1x512xf32, #tpu.memory_space<vmem>>, vector<1x256xf32>
    %c84 = arith.constant 84 : index
    %c0_220 = arith.constant 0 : index
    %328 = vector.load %arg2[%c84, %c0_220] : memref<98x256xf32, #tpu.memory_space<vmem>>, vector<1x256xf32>
    %329 = arith.mulf %327, %328 : vector<1x256xf32>
    %330 = arith.addf %326, %329 : vector<1x256xf32>
    %331 = arith.addf %323, %330 : vector<1x256xf32>
    %c0_221 = arith.constant 0 : index
    %c158 = arith.constant 158 : index
    %332 = vector.load %arg4[%c0_221, %c158] : memref<1x512xf32, #tpu.memory_space<vmem>>, vector<1x256xf32>
    %c36 = arith.constant 36 : index
    %c0_222 = arith.constant 0 : index
    %333 = vector.load %arg2[%c36, %c0_222] : memref<98x256xf32, #tpu.memory_space<vmem>>, vector<1x256xf32>
    %334 = arith.mulf %332, %333 : vector<1x256xf32>
    %c0_223 = arith.constant 0 : index
    %c158_224 = arith.constant 158 : index
    %335 = vector.load %arg5[%c0_223, %c158_224] : memref<1x512xf32, #tpu.memory_space<vmem>>, vector<1x256xf32>
    %c85 = arith.constant 85 : index
    %c0_225 = arith.constant 0 : index
    %336 = vector.load %arg2[%c85, %c0_225] : memref<98x256xf32, #tpu.memory_space<vmem>>, vector<1x256xf32>
    %337 = arith.mulf %335, %336 : vector<1x256xf32>
    %338 = arith.addf %334, %337 : vector<1x256xf32>
    %339 = arith.addf %331, %338 : vector<1x256xf32>
    %c0_226 = arith.constant 0 : index
    %c159 = arith.constant 159 : index
    %340 = vector.load %arg4[%c0_226, %c159] : memref<1x512xf32, #tpu.memory_space<vmem>>, vector<1x256xf32>
    %c37 = arith.constant 37 : index
    %c0_227 = arith.constant 0 : index
    %341 = vector.load %arg2[%c37, %c0_227] : memref<98x256xf32, #tpu.memory_space<vmem>>, vector<1x256xf32>
    %342 = arith.mulf %340, %341 : vector<1x256xf32>
    %c0_228 = arith.constant 0 : index
    %c159_229 = arith.constant 159 : index
    %343 = vector.load %arg5[%c0_228, %c159_229] : memref<1x512xf32, #tpu.memory_space<vmem>>, vector<1x256xf32>
    %c86 = arith.constant 86 : index
    %c0_230 = arith.constant 0 : index
    %344 = vector.load %arg2[%c86, %c0_230] : memref<98x256xf32, #tpu.memory_space<vmem>>, vector<1x256xf32>
    %345 = arith.mulf %343, %344 : vector<1x256xf32>
    %346 = arith.addf %342, %345 : vector<1x256xf32>
    %347 = arith.addf %339, %346 : vector<1x256xf32>
    %c0_231 = arith.constant 0 : index
    %c160 = arith.constant 160 : index
    %348 = vector.load %arg4[%c0_231, %c160] : memref<1x512xf32, #tpu.memory_space<vmem>>, vector<1x256xf32>
    %c38 = arith.constant 38 : index
    %c0_232 = arith.constant 0 : index
    %349 = vector.load %arg2[%c38, %c0_232] : memref<98x256xf32, #tpu.memory_space<vmem>>, vector<1x256xf32>
    %350 = arith.mulf %348, %349 : vector<1x256xf32>
    %c0_233 = arith.constant 0 : index
    %c160_234 = arith.constant 160 : index
    %351 = vector.load %arg5[%c0_233, %c160_234] : memref<1x512xf32, #tpu.memory_space<vmem>>, vector<1x256xf32>
    %c87 = arith.constant 87 : index
    %c0_235 = arith.constant 0 : index
    %352 = vector.load %arg2[%c87, %c0_235] : memref<98x256xf32, #tpu.memory_space<vmem>>, vector<1x256xf32>
    %353 = arith.mulf %351, %352 : vector<1x256xf32>
    %354 = arith.addf %350, %353 : vector<1x256xf32>
    %355 = arith.addf %347, %354 : vector<1x256xf32>
    %c0_236 = arith.constant 0 : index
    %c161 = arith.constant 161 : index
    %356 = vector.load %arg4[%c0_236, %c161] : memref<1x512xf32, #tpu.memory_space<vmem>>, vector<1x256xf32>
    %c39 = arith.constant 39 : index
    %c0_237 = arith.constant 0 : index
    %357 = vector.load %arg2[%c39, %c0_237] : memref<98x256xf32, #tpu.memory_space<vmem>>, vector<1x256xf32>
    %358 = arith.mulf %356, %357 : vector<1x256xf32>
    %c0_238 = arith.constant 0 : index
    %c161_239 = arith.constant 161 : index
    %359 = vector.load %arg5[%c0_238, %c161_239] : memref<1x512xf32, #tpu.memory_space<vmem>>, vector<1x256xf32>
    %c88 = arith.constant 88 : index
    %c0_240 = arith.constant 0 : index
    %360 = vector.load %arg2[%c88, %c0_240] : memref<98x256xf32, #tpu.memory_space<vmem>>, vector<1x256xf32>
    %361 = arith.mulf %359, %360 : vector<1x256xf32>
    %362 = arith.addf %358, %361 : vector<1x256xf32>
    %363 = arith.addf %355, %362 : vector<1x256xf32>
    %c0_241 = arith.constant 0 : index
    %c162 = arith.constant 162 : index
    %364 = vector.load %arg4[%c0_241, %c162] : memref<1x512xf32, #tpu.memory_space<vmem>>, vector<1x256xf32>
    %c40 = arith.constant 40 : index
    %c0_242 = arith.constant 0 : index
    %365 = vector.load %arg2[%c40, %c0_242] : memref<98x256xf32, #tpu.memory_space<vmem>>, vector<1x256xf32>
    %366 = arith.mulf %364, %365 : vector<1x256xf32>
    %c0_243 = arith.constant 0 : index
    %c162_244 = arith.constant 162 : index
    %367 = vector.load %arg5[%c0_243, %c162_244] : memref<1x512xf32, #tpu.memory_space<vmem>>, vector<1x256xf32>
    %c89 = arith.constant 89 : index
    %c0_245 = arith.constant 0 : index
    %368 = vector.load %arg2[%c89, %c0_245] : memref<98x256xf32, #tpu.memory_space<vmem>>, vector<1x256xf32>
    %369 = arith.mulf %367, %368 : vector<1x256xf32>
    %370 = arith.addf %366, %369 : vector<1x256xf32>
    %371 = arith.addf %363, %370 : vector<1x256xf32>
    %c0_246 = arith.constant 0 : index
    %c163 = arith.constant 163 : index
    %372 = vector.load %arg4[%c0_246, %c163] : memref<1x512xf32, #tpu.memory_space<vmem>>, vector<1x256xf32>
    %c41 = arith.constant 41 : index
    %c0_247 = arith.constant 0 : index
    %373 = vector.load %arg2[%c41, %c0_247] : memref<98x256xf32, #tpu.memory_space<vmem>>, vector<1x256xf32>
    %374 = arith.mulf %372, %373 : vector<1x256xf32>
    %c0_248 = arith.constant 0 : index
    %c163_249 = arith.constant 163 : index
    %375 = vector.load %arg5[%c0_248, %c163_249] : memref<1x512xf32, #tpu.memory_space<vmem>>, vector<1x256xf32>
    %c90 = arith.constant 90 : index
    %c0_250 = arith.constant 0 : index
    %376 = vector.load %arg2[%c90, %c0_250] : memref<98x256xf32, #tpu.memory_space<vmem>>, vector<1x256xf32>
    %377 = arith.mulf %375, %376 : vector<1x256xf32>
    %378 = arith.addf %374, %377 : vector<1x256xf32>
    %379 = arith.addf %371, %378 : vector<1x256xf32>
    %c0_251 = arith.constant 0 : index
    %c173 = arith.constant 173 : index
    %380 = vector.load %arg4[%c0_251, %c173] : memref<1x512xf32, #tpu.memory_space<vmem>>, vector<1x256xf32>
    %c42 = arith.constant 42 : index
    %c0_252 = arith.constant 0 : index
    %381 = vector.load %arg2[%c42, %c0_252] : memref<98x256xf32, #tpu.memory_space<vmem>>, vector<1x256xf32>
    %382 = arith.mulf %380, %381 : vector<1x256xf32>
    %c0_253 = arith.constant 0 : index
    %c173_254 = arith.constant 173 : index
    %383 = vector.load %arg5[%c0_253, %c173_254] : memref<1x512xf32, #tpu.memory_space<vmem>>, vector<1x256xf32>
    %c91 = arith.constant 91 : index
    %c0_255 = arith.constant 0 : index
    %384 = vector.load %arg2[%c91, %c0_255] : memref<98x256xf32, #tpu.memory_space<vmem>>, vector<1x256xf32>
    %385 = arith.mulf %383, %384 : vector<1x256xf32>
    %386 = arith.addf %382, %385 : vector<1x256xf32>
    %387 = arith.addf %379, %386 : vector<1x256xf32>
    %c0_256 = arith.constant 0 : index
    %c174 = arith.constant 174 : index
    %388 = vector.load %arg4[%c0_256, %c174] : memref<1x512xf32, #tpu.memory_space<vmem>>, vector<1x256xf32>
    %c43 = arith.constant 43 : index
    %c0_257 = arith.constant 0 : index
    %389 = vector.load %arg2[%c43, %c0_257] : memref<98x256xf32, #tpu.memory_space<vmem>>, vector<1x256xf32>
    %390 = arith.mulf %388, %389 : vector<1x256xf32>
    %c0_258 = arith.constant 0 : index
    %c174_259 = arith.constant 174 : index
    %391 = vector.load %arg5[%c0_258, %c174_259] : memref<1x512xf32, #tpu.memory_space<vmem>>, vector<1x256xf32>
    %c92 = arith.constant 92 : index
    %c0_260 = arith.constant 0 : index
    %392 = vector.load %arg2[%c92, %c0_260] : memref<98x256xf32, #tpu.memory_space<vmem>>, vector<1x256xf32>
    %393 = arith.mulf %391, %392 : vector<1x256xf32>
    %394 = arith.addf %390, %393 : vector<1x256xf32>
    %395 = arith.addf %387, %394 : vector<1x256xf32>
    %c0_261 = arith.constant 0 : index
    %c175 = arith.constant 175 : index
    %396 = vector.load %arg4[%c0_261, %c175] : memref<1x512xf32, #tpu.memory_space<vmem>>, vector<1x256xf32>
    %c44 = arith.constant 44 : index
    %c0_262 = arith.constant 0 : index
    %397 = vector.load %arg2[%c44, %c0_262] : memref<98x256xf32, #tpu.memory_space<vmem>>, vector<1x256xf32>
    %398 = arith.mulf %396, %397 : vector<1x256xf32>
    %c0_263 = arith.constant 0 : index
    %c175_264 = arith.constant 175 : index
    %399 = vector.load %arg5[%c0_263, %c175_264] : memref<1x512xf32, #tpu.memory_space<vmem>>, vector<1x256xf32>
    %c93_265 = arith.constant 93 : index
    %c0_266 = arith.constant 0 : index
    %400 = vector.load %arg2[%c93_265, %c0_266] : memref<98x256xf32, #tpu.memory_space<vmem>>, vector<1x256xf32>
    %401 = arith.mulf %399, %400 : vector<1x256xf32>
    %402 = arith.addf %398, %401 : vector<1x256xf32>
    %403 = arith.addf %395, %402 : vector<1x256xf32>
    %c0_267 = arith.constant 0 : index
    %c176 = arith.constant 176 : index
    %404 = vector.load %arg4[%c0_267, %c176] : memref<1x512xf32, #tpu.memory_space<vmem>>, vector<1x256xf32>
    %c45 = arith.constant 45 : index
    %c0_268 = arith.constant 0 : index
    %405 = vector.load %arg2[%c45, %c0_268] : memref<98x256xf32, #tpu.memory_space<vmem>>, vector<1x256xf32>
    %406 = arith.mulf %404, %405 : vector<1x256xf32>
    %c0_269 = arith.constant 0 : index
    %c176_270 = arith.constant 176 : index
    %407 = vector.load %arg5[%c0_269, %c176_270] : memref<1x512xf32, #tpu.memory_space<vmem>>, vector<1x256xf32>
    %c94_271 = arith.constant 94 : index
    %c0_272 = arith.constant 0 : index
    %408 = vector.load %arg2[%c94_271, %c0_272] : memref<98x256xf32, #tpu.memory_space<vmem>>, vector<1x256xf32>
    %409 = arith.mulf %407, %408 : vector<1x256xf32>
    %410 = arith.addf %406, %409 : vector<1x256xf32>
    %411 = arith.addf %403, %410 : vector<1x256xf32>
    %c0_273 = arith.constant 0 : index
    %c177 = arith.constant 177 : index
    %412 = vector.load %arg4[%c0_273, %c177] : memref<1x512xf32, #tpu.memory_space<vmem>>, vector<1x256xf32>
    %c46 = arith.constant 46 : index
    %c0_274 = arith.constant 0 : index
    %413 = vector.load %arg2[%c46, %c0_274] : memref<98x256xf32, #tpu.memory_space<vmem>>, vector<1x256xf32>
    %414 = arith.mulf %412, %413 : vector<1x256xf32>
    %c0_275 = arith.constant 0 : index
    %c177_276 = arith.constant 177 : index
    %415 = vector.load %arg5[%c0_275, %c177_276] : memref<1x512xf32, #tpu.memory_space<vmem>>, vector<1x256xf32>
    %c95_277 = arith.constant 95 : index
    %c0_278 = arith.constant 0 : index
    %416 = vector.load %arg2[%c95_277, %c0_278] : memref<98x256xf32, #tpu.memory_space<vmem>>, vector<1x256xf32>
    %417 = arith.mulf %415, %416 : vector<1x256xf32>
    %418 = arith.addf %414, %417 : vector<1x256xf32>
    %419 = arith.addf %411, %418 : vector<1x256xf32>
    %c0_279 = arith.constant 0 : index
    %c178 = arith.constant 178 : index
    %420 = vector.load %arg4[%c0_279, %c178] : memref<1x512xf32, #tpu.memory_space<vmem>>, vector<1x256xf32>
    %c47 = arith.constant 47 : index
    %c0_280 = arith.constant 0 : index
    %421 = vector.load %arg2[%c47, %c0_280] : memref<98x256xf32, #tpu.memory_space<vmem>>, vector<1x256xf32>
    %422 = arith.mulf %420, %421 : vector<1x256xf32>
    %c0_281 = arith.constant 0 : index
    %c178_282 = arith.constant 178 : index
    %423 = vector.load %arg5[%c0_281, %c178_282] : memref<1x512xf32, #tpu.memory_space<vmem>>, vector<1x256xf32>
    %c96_283 = arith.constant 96 : index
    %c0_284 = arith.constant 0 : index
    %424 = vector.load %arg2[%c96_283, %c0_284] : memref<98x256xf32, #tpu.memory_space<vmem>>, vector<1x256xf32>
    %425 = arith.mulf %423, %424 : vector<1x256xf32>
    %426 = arith.addf %422, %425 : vector<1x256xf32>
    %427 = arith.addf %419, %426 : vector<1x256xf32>
    %c0_285 = arith.constant 0 : index
    %c179 = arith.constant 179 : index
    %428 = vector.load %arg4[%c0_285, %c179] : memref<1x512xf32, #tpu.memory_space<vmem>>, vector<1x256xf32>
    %c48 = arith.constant 48 : index
    %c0_286 = arith.constant 0 : index
    %429 = vector.load %arg2[%c48, %c0_286] : memref<98x256xf32, #tpu.memory_space<vmem>>, vector<1x256xf32>
    %430 = arith.mulf %428, %429 : vector<1x256xf32>
    %c0_287 = arith.constant 0 : index
    %c179_288 = arith.constant 179 : index
    %431 = vector.load %arg5[%c0_287, %c179_288] : memref<1x512xf32, #tpu.memory_space<vmem>>, vector<1x256xf32>
    %c97_289 = arith.constant 97 : index
    %c0_290 = arith.constant 0 : index
    %432 = vector.load %arg2[%c97_289, %c0_290] : memref<98x256xf32, #tpu.memory_space<vmem>>, vector<1x256xf32>
    %433 = arith.mulf %431, %432 : vector<1x256xf32>
    %434 = arith.addf %430, %433 : vector<1x256xf32>
    %435 = arith.addf %427, %434 : vector<1x256xf32>
    %436 = arith.negf %435 : vector<1x256xf32>
    %437 = math.exp %436 : vector<1x256xf32>
    %cst_291 = arith.constant 1.000000e+00 : f32
    %438 = vector.broadcast %cst_291 : f32 to vector<1x256xf32>
    %439 = arith.addf %438, %437 : vector<1x256xf32>
    %440 = arith.divf %438, %439 : vector<1x256xf32>
    %c0_292 = arith.constant 0 : index
    %c0_293 = arith.constant 0 : index
    %c0_294 = arith.constant 0 : index
    %441 = vector.load %arg3[%c0_292, %c0_293, %c0_294] : memref<1x1x256xf32, #tpu.memory_space<vmem>>, vector<1x1x256xf32>
    %442 = vector.shape_cast %441 : vector<1x1x256xf32> to vector<1x256xf32>
    %443 = vector.shape_cast %440 : vector<1x256xf32> to vector<1x1x256xf32>
    tpu.vector_store %arg3[%c0_292, %c0_293, %c0_294], %443 {strides = array<i32>} : memref<1x1x256xf32, #tpu.memory_space<vmem>>, vector<1x1x256xf32>,
    return
  }
  func.func @transform_0(%arg0: i32) -> (i32, i32, i32) {
    %c0_i32 = arith.constant 0 : i32
    %c0_i32_0 = arith.constant 0 : i32
    %c0_i32_1 = arith.constant 0 : i32
    return %arg0, %c0_i32, %c0_i32_0 : i32, i32, i32
  }
  func.func @transform_1(%arg0: i32) -> (i32, i32) {
    %c0_i32 = arith.constant 0 : i32
    %c0_i32_0 = arith.constant 0 : i32
    %c0_i32_1 = arith.constant 0 : i32
    return %c0_i32, %c0_i32_0 : i32, i32
  }
  func.func @transform_2(%arg0: i32) -> (i32, i32, i32) {
    %c0_i32 = arith.constant 0 : i32
    %c0_i32_0 = arith.constant 0 : i32
    %c0_i32_1 = arith.constant 0 : i32
    return %arg0, %c0_i32, %c0_i32_0 : i32, i32, i32
  }
}

</mosaic_0001>

<llo_original>
// kernel: tpu_custom_call.1
$region0: #{tpu_custom_call.1}
  #allocation0 [shape = 'u32[]', space=smem, size = 0x4, offset = 0x4, fixed_abs, tag = 'smem constant byte address 0x4 - core index']
  #allocation1 [shape = 'u32[144,128]{1,0:T(1,128)}', space=vmem, size = 0x12000, scoped, tag = 'internal scratch']
  #allocation2 [shape = 'f32[1,512]{1,0:T(1,128)}', space=vmem, size = 0x800, scoped, tag = 'scratch operand']
  #allocation3 [shape = 'f32[1,512]{1,0:T(1,128)}', space=vmem, size = 0x800, scoped, tag = 'scratch operand']
  %s0 = inlined_call_operand.hbm [shape: f32[2,32,256], index: 0, kind: input, shape index: {}]
  %s1 = inlined_call_operand.hbm [shape: f32[98,256], index: 1, kind: input, shape index: {}]
  %s2 = inlined_call_operand.hbm [shape: f32[2,1,256], index: 2, kind: output, shape index: {}]
  %s3 = sld [smem:[#allocation0]]
  $region49: #{tpu_custom_call.1} parent=0
    _
  %s5 = ssub.s32 1, %s3
  %s6 = scalar_select 0, %s5, %s3
  $region1: #{tpu_custom_call.1} parent=0
    #allocation4 [shape = 'u8[65536]{0}', space=vmem, size = 0x10000, scoped, tag = 'input window, operand 0']
    #allocation5 [shape = 's32[2]{0}', space=sflag, size = 0x8, scoped, tag = 'scoped memory for tpu_custom_call.1']
    #allocation6 [shape = 's32[2]{0}', space=sflag, size = 0x8, scoped, tag = 'scoped memory for tpu_custom_call.1']
    #allocation7 [shape = 'u8[106496]{0}', space=vmem, size = 0x1a000, scoped, tag = 'input window, operand 1, single buffered']
    #allocation8 [shape = 's32[1]{0}', space=sflag, size = 0x4, scoped, tag = 'scoped memory for tpu_custom_call.1']
    #allocation9 [shape = 'u8[2048]{0}', space=vmem, size = 0x800, scoped, tag = 'output window, operand 0']
    %7 = vsyncpa [#allocation5], 0
    %s8 = scalar_lea.sflag [#allocation5], 1
    %9 = vsyncpa %s8, 0
    %10 = vsyncpa [#allocation8], 0
    %11 = vsyncpa [#allocation6], 0
    %s12 = scalar_lea.sflag [#allocation6], 1
    %13 = vsyncpa %s12, 0
    loop: start=0, step=1, limit=4
    $region2: #{tpu_custom_call.1} parent=1 // loop_pre_header
      _
    $region3: #{tpu_custom_call.1} parent=1 // loop_header
      %s15 = sphi 0, %s19
      %p16 = scmp.ge.s32.totalorder %s15, 4
      %s25 = sphi 0, %s27
      %s28 = sphi 0, %s25
      %s29 = sphi 0, %s28
      %s45 = sphi 0, %s29
      %s49 = sphi 0, %s49
      %s51 = sphi 0, %s49
      %s52 = sphi 0, %s51
      %s66 = sphi 0, %s52
      %s72 = sphi 0, %s74
      %s75 = sphi 0, %s72
      %s76 = sphi 0, %s75
      %s92 = sphi 0, %s76
    $region4: #{tpu_custom_call.1} parent=1 // loop_header_branch
      %18 = sbr.rel (%p16) target = $region8
    $region5: #{tpu_custom_call.1} parent=1 // loop_body
      %s20 = ssub.s32 %s15, 1
      %s21 = ssub.s32 %s15, 2
      %s22 = sadd.s32 %s15, 1
      %s23 = ssub.s32 %s15, %s22
      %p24 = scmp.eq.s32.totalorder %s23, 0
      %s26 = sadd.s32 %s25, 1
      %s27 = scalar_select %p24, %s25, %s26
      %p30 = pneg %p24
      %p31 = scmp.eq.s32.totalorder %s15, 1
      %p32 = por %p30, %p31
      %p33 = scmp.ne.s32.totalorder %s25, %s28
      %p34 = scmp.eq.s32.totalorder %s15, 0
      %p35 = por %p33, %p34
      %p36 = scmp.ne.s32.totalorder %s25, %s28
      %p37 = scmp.eq.s32.totalorder %s20, 1
      %p38 = por %p36, %p37
      %p39 = scmp.ne.s32.totalorder %s28, %s29
      %p40 = scmp.eq.s32.totalorder %s20, 0
      %p41 = por %p39, %p40
      %p42 = scmp.ne.s32.totalorder %s28, %s29
      %p43 = scmp.eq.s32.totalorder %s21, 1
      %p44 = por %p42, %p43
      %p46 = scmp.ne.s32.totalorder %s29, %s45
      %p47 = scmp.eq.s32.totalorder %s21, 0
      %p48 = por %p46, %p47
      %s50 = sadd.s32 %s49, 1
      %p53 = scmp.eq.s32.totalorder %s15, 1
      %p54 = scmp.ne.s32.totalorder %s49, %s51
      %p55 = scmp.eq.s32.totalorder %s15, 0
      %p56 = por %p54, %p55
      %p57 = scmp.ne.s32.totalorder %s49, %s51
      %p58 = scmp.eq.s32.totalorder %s20, 1
      %p59 = por %p57, %p58
      %p60 = scmp.ne.s32.totalorder %s51, %s52
      %p61 = scmp.eq.s32.totalorder %s20, 0
      %p62 = por %p60, %p61
      %p63 = scmp.ne.s32.totalorder %s51, %s52
      %p64 = scmp.eq.s32.totalorder %s21, 1
      %p65 = por %p63, %p64
      %p67 = scmp.ne.s32.totalorder %s52, %s66
      %p68 = scmp.eq.s32.totalorder %s21, 0
      %p69 = por %p67, %p68
      %s70 = ssub.s32 %s15, %s22
      %p71 = scmp.eq.s32.totalorder %s70, 0
      %s73 = sadd.s32 %s72, 1
      %s74 = scalar_select %p71, %s72, %s73
      %p77 = pneg %p71
      %p78 = scmp.eq.s32.totalorder %s15, 1
      %p79 = por %p77, %p78
      %p80 = scmp.ne.s32.totalorder %s72, %s75
      %p81 = scmp.eq.s32.totalorder %s15, 0
      %p82 = por %p80, %p81
      %p83 = scmp.ne.s32.totalorder %s72, %s75
      %p84 = scmp.eq.s32.totalorder %s20, 1
      %p85 = por %p83, %p84
      %p86 = scmp.ne.s32.totalorder %s75, %s76
      %p87 = scmp.eq.s32.totalorder %s20, 0
      %p88 = por %p86, %p87
      %p89 = scmp.ne.s32.totalorder %s75, %s76
      %p90 = scmp.eq.s32.totalorder %s21, 1
      %p91 = por %p89, %p90
      %p93 = scmp.ne.s32.totalorder %s76, %s92
      %p94 = scmp.eq.s32.totalorder %s21, 0
      %p95 = por %p93, %p94
      %p96 = scmp.le.s32.totalorder 1, %s15
      %p97 = scmp.lt.s32.totalorder %s15, 3
      %p98 = pnand %p96, %p97
      %p99 = pneg %p98
      // Predicated region
      $region9: #{tpu_custom_call.1} parent=5 // pred_check
        _
      $region10: #{tpu_custom_call.1} parent=5 // pred_check_branch
        %101 = sbr.rel (%p98) target = $region12
      $region11: #{tpu_custom_call.1} parent=5 // pred_region
        %s102 = ssub.s32 %s15, 1
        // Predicated region
        $region13: #{tpu_custom_call.1} parent=11 // pred_check
          %p103 = pneg %p62
        $region14: #{tpu_custom_call.1} parent=11 // pred_check_branch
          %105 = sbr.rel (%p103) target = $region16
        $region15: #{tpu_custom_call.1} parent=11 // pred_region
          %s107 = ssub.s32 3328, 3328
          %108 = vsyncadd [#allocation8], %s107
          %s109 = sshll.u32 [#allocation7], 4
          %s110 = int_to_ptr.vmem [resolvable:$true] %s109
          %115 = dma.hbm_to_vmem [thread:$0]  %s1, 3328, %s110, [#allocation8], 256, 256, 16
        $region16: #{tpu_custom_call.1} parent=11 // pred_fallthru
          _
      $region12: #{tpu_custom_call.1} parent=5 // pred_fallthru
        _
      %p116 = scmp.lt.s32.totalorder %s15, 2
      // Predicated region
      $region17: #{tpu_custom_call.1} parent=5 // pred_check
        %p117 = pneg %p116
      $region18: #{tpu_custom_call.1} parent=5 // pred_check_branch
        %119 = sbr.rel (%p117) target = $region20
      $region19: #{tpu_custom_call.1} parent=5 // pred_region
        // Predicated region
        $region21: #{tpu_custom_call.1} parent=19 // pred_check
          %p120 = pneg %p35
        $region22: #{tpu_custom_call.1} parent=19 // pred_check_branch
          %122 = sbr.rel (%p120) target = $region24
        $region23: #{tpu_custom_call.1} parent=19 // pred_region
          %s123 = sand.u32 %s25, 1
          %s124 = scalar_lea.sflag [#allocation5], %s123
          %s125 = sand.u32 %s25, 1
          %s126 = smul.addr %s125, 64
          %s127 = scalar_lea.vmem [#allocation4], %s126
          %s129 = ssub.s32 1024, 1024
          %130 = vsyncadd %s124, %s129
          %s131 = smul.addr %s15, 8
          %s132 = smul.addr %s131, 128
          %s133 = scalar_lea.hbm %s0, %s132
          %s134 = sshll.u32 %s127, 4
          %s135 = int_to_ptr.vmem [resolvable:$true] %s134
          %140 = dma.hbm_to_vmem [thread:$0]  %s133, 1024, %s135, %s124, 256, 256, 16
        $region24: #{tpu_custom_call.1} parent=19 // pred_fallthru
          _
      $region20: #{tpu_custom_call.1} parent=5 // pred_fallthru
        _
      %p141 = scmp.le.s32.totalorder 1, %s15
      %p142 = scmp.lt.s32.totalorder %s15, 3
      %p143 = pnand %p141, %p142
      %p144 = pneg %p143
      // Predicated region
      $region25: #{tpu_custom_call.1} parent=5 // pred_check
        _
      $region26: #{tpu_custom_call.1} parent=5 // pred_check_branch
        %146 = sbr.rel (%p143) target = $region28
      $region27: #{tpu_custom_call.1} parent=5 // pred_region
        %s147 = ssub.s32 %s15, 1
        %s148 = sand.u32 %s28, 1
        %s149 = scalar_lea.sflag [#allocation5], %s148
        %s150 = sand.u32 %s28, 1
        %s151 = smul.addr %s150, 64
        %s152 = scalar_lea.vmem [#allocation4], %s151
        // Predicated region
        $region29: #{tpu_custom_call.1} parent=27 // pred_check
          %p153 = pneg %p41
        $region30: #{tpu_custom_call.1} parent=27 // pred_check_branch
          %155 = sbr.rel (%p153) target = $region32
        $region31: #{tpu_custom_call.1} parent=27 // pred_region
          %156 = dma.done %s149, 1024
        $region32: #{tpu_custom_call.1} parent=27 // pred_fallthru
          _
        // Predicated region
        $region33: #{tpu_custom_call.1} parent=27 // pred_check
          %p157 = pneg %p62
        $region34: #{tpu_custom_call.1} parent=27 // pred_check_branch
          %159 = sbr.rel (%p157) target = $region36
        $region35: #{tpu_custom_call.1} parent=27 // pred_region
          %160 = dma.done [#allocation8], 3328
        $region36: #{tpu_custom_call.1} parent=27 // pred_fallthru
          _
        %s161 = sand.u32 %s28, 1
        %s162 = scalar_lea.sflag [#allocation5], %s161
        %s163 = sand.u32 %s28, 1
        %s164 = smul.addr %s163, 64
        %s165 = scalar_lea.vmem [#allocation4], %s164
        %p166 = pneg %p41
        %p167 = pneg %p38
        %p168 = pneg %p62
        %p169 = pneg %p59
        %p170 = pneg %p88
        %p171 = pneg %p85
        %s172 = sand.u32 %s75, 1
        %s173 = scalar_lea.sflag [#allocation6], %s172
        %s174 = sand.u32 %s75, 1
        %s175 = smul.addr %s174, 2
        %s176 = scalar_lea.vmem [#allocation9], %s175
        %s177 = smul.u32 0, 2
        %s178 = smul.addr %s177, 8
        %s179 = scalar_lea.vmem %s152, %s178 [#allocation4]
        %v180 = vld [vmem:[%s179] sm:$0xff]
        %v181 = vld [vmem:[%s179 + $0x8] sm:$0xff]
        %v182 = vrot.slane %v180, 4
        %v183 = vadd.f32 %v180, %v182
        %v184 = vrot.slane %v183, 2
        %v185 = vadd.f32 %v183, %v184
        %v186 = vrot.slane %v185, 1
        %v187 = vadd.f32 %v185, %v186
        %v188 = vrot.slane %v181, 4
        %v189 = vadd.f32 %v181, %v188
        %v190 = vrot.slane %v189, 2
        %v191 = vadd.f32 %v189, %v190
        %v192 = vrot.slane %v191, 1
        %v193 = vadd.f32 %v191, %v192
        %v194 = vrot.slane %v180, 4
        %v195 = vmax.f32 %v180, %v194
        %v196 = vrot.slane %v195, 2
        %v197 = vmax.f32 %v195, %v196
        %v198 = vrot.slane %v197, 1
        %v199 = vmax.f32 %v197, %v198
        %v200 = vrot.slane %v181, 4
        %v201 = vmax.f32 %v181, %v200
        %v202 = vrot.slane %v201, 2
        %v203 = vmax.f32 %v201, %v202
        %v204 = vrot.slane %v203, 1
        %v205 = vmax.f32 %v203, %v204
        %v206 = vadd.f32 %v187, 0.0
        %v207 = vadd.f32 %v193, 0.0
        %s208 = smul.u32 1, 2
        %s209 = smul.addr %s208, 8
        %s210 = scalar_lea.vmem %s152, %s209 [#allocation4]
        %v211 = vld [vmem:[%s210] sm:$0xff]
        %v212 = vld [vmem:[%s210 + $0x8] sm:$0xff]
        %v213 = vrot.slane %v211, 4
        %v214 = vadd.f32 %v211, %v213
        %v215 = vrot.slane %v214, 2
        %v216 = vadd.f32 %v214, %v215
        %v217 = vrot.slane %v216, 1
        %v218 = vadd.f32 %v216, %v217
        %v219 = vrot.slane %v212, 4
        %v220 = vadd.f32 %v212, %v219
        %v221 = vrot.slane %v220, 2
        %v222 = vadd.f32 %v220, %v221
        %v223 = vrot.slane %v222, 1
        %v224 = vadd.f32 %v222, %v223
        %v225 = vrot.slane %v211, 4
        %v226 = vmax.f32 %v211, %v225
        %v227 = vrot.slane %v226, 2
        %v228 = vmax.f32 %v226, %v227
        %v229 = vrot.slane %v228, 1
        %v230 = vmax.f32 %v228, %v229
        %v231 = vrot.slane %v212, 4
        %v232 = vmax.f32 %v212, %v231
        %v233 = vrot.slane %v232, 2
        %v234 = vmax.f32 %v232, %v233
        %v235 = vrot.slane %v234, 1
        %v236 = vmax.f32 %v234, %v235
        %v237 = vadd.f32 %v206, %v218
        %v238 = vadd.f32 %v207, %v224
        %v239 = vmax.f32 %v199, %v230
        %v240 = vmax.f32 %v205, %v236
        %s241 = smul.u32 2, 2
        %s242 = smul.addr %s241, 8
        %s243 = scalar_lea.vmem %s152, %s242 [#allocation4]
        %v244 = vld [vmem:[%s243] sm:$0xff]
        %v245 = vld [vmem:[%s243 + $0x8] sm:$0xff]
        %v246 = vrot.slane %v244, 4
        %v247 = vadd.f32 %v244, %v246
        %v248 = vrot.slane %v247, 2
        %v249 = vadd.f32 %v247, %v248
        %v250 = vrot.slane %v249, 1
        %v251 = vadd.f32 %v249, %v250
        %v252 = vrot.slane %v245, 4
        %v253 = vadd.f32 %v245, %v252
        %v254 = vrot.slane %v253, 2
        %v255 = vadd.f32 %v253, %v254
        %v256 = vrot.slane %v255, 1
        %v257 = vadd.f32 %v255, %v256
        %v258 = vrot.slane %v244, 4
        %v259 = vmax.f32 %v244, %v258
        %v260 = vrot.slane %v259, 2
        %v261 = vmax.f32 %v259, %v260
        %v262 = vrot.slane %v261, 1
        %v263 = vmax.f32 %v261, %v262
        %v264 = vrot.slane %v245, 4
        %v265 = vmax.f32 %v245, %v264
        %v266 = vrot.slane %v265, 2
        %v267 = vmax.f32 %v265, %v266
        %v268 = vrot.slane %v267, 1
        %v269 = vmax.f32 %v267, %v268
        %v270 = vadd.f32 %v237, %v251
        %v271 = vadd.f32 %v238, %v257
        %v272 = vmax.f32 %v239, %v263
        %v273 = vmax.f32 %v240, %v269
        %s274 = smul.u32 3, 2
        %s275 = smul.addr %s274, 8
        %s276 = scalar_lea.vmem %s152, %s275 [#allocation4]
        %v277 = vld [vmem:[%s276] sm:$0xff]
        %v278 = vld [vmem:[%s276 + $0x8] sm:$0xff]
        %v279 = vrot.slane %v277, 4
        %v280 = vadd.f32 %v277, %v279
        %v281 = vrot.slane %v280, 2
        %v282 = vadd.f32 %v280, %v281
        %v283 = vrot.slane %v282, 1
        %v284 = vadd.f32 %v282, %v283
        %v285 = vrot.slane %v278, 4
        %v286 = vadd.f32 %v278, %v285
        %v287 = vrot.slane %v286, 2
        %v288 = vadd.f32 %v286, %v287
        %v289 = vrot.slane %v288, 1
        %v290 = vadd.f32 %v288, %v289
        %v291 = vrot.slane %v277, 4
        %v292 = vmax.f32 %v277, %v291
        %v293 = vrot.slane %v292, 2
        %v294 = vmax.f32 %v292, %v293
        %v295 = vrot.slane %v294, 1
        %v296 = vmax.f32 %v294, %v295
        %v297 = vrot.slane %v278, 4
        %v298 = vmax.f32 %v278, %v297
        %v299 = vrot.slane %v298, 2
        %v300 = vmax.f32 %v298, %v299
        %v301 = vrot.slane %v300, 1
        %v302 = vmax.f32 %v300, %v301
        %v303 = vadd.f32 %v270, %v284
        %v304 = vadd.f32 %v271, %v290
        %v305 = vmax.f32 %v272, %v296
        %v306 = vmax.f32 %v273, %v302
        %v307 = vmul.f32 %v303, 0.03125
        %v308 = vmul.f32 %v304, 0.03125
        %v309 = vlaneseq
        %vm310 = vcmp.ge.s32.totalorder %v309, 0
        %vm311 = vcmp.lt.s32.totalorder %v309, 128
        %vm312 = vmand %vm310, %vm311
        %313 = vst.msk [vmem:[#allocation2] sm:$0x1] %vm312, 0.0
        %314 = vst.msk [vmem:[#allocation2 + $0x3] sm:$0x1] %vm312, 0.0
        %315 = vst.msk [vmem:[#allocation3] sm:$0x1] %vm312, 0.0
        %316 = vst.msk [vmem:[#allocation3 + $0x3] sm:$0x1] %vm312, 0.0
        %v319 = vcombine.low %v307, %v308
        %v321 = vunpack.c.l.s4 1966171168
        %v322 = vunpack.c.0.s8 %v321
        %v323 = vlaneseq
        %v324 = vshrl.u32 %v323, 7
        %v325 = vsub.s32 %v322, %v324
        %v326 = vrot.slane %v319, %v325
        %v328 = vunpack.c.l.s4 1966171168
        %v329 = vunpack.c.0.s8 %v328
        %v330 = vlaneseq
        %v331 = vshrl.u32 %v330, 7
        %v332 = vsub.s32 %v329, %v331
        %v333 = vrot.slane %v326, %v332
        %vm335 = vcmp.lt.s32.totalorder %v309, 256
        %vm336 = vmand %vm310, %vm335
        %337 = vst.msk [vmem:[#allocation2 + $0x1] sm:$0x3] %vm336, %v333
        %v340 = vcombine.low %v305, %v306
        %v342 = vunpack.c.l.s4 1966171168
        %v343 = vunpack.c.0.s8 %v342
        %v344 = vlaneseq
        %v345 = vshrl.u32 %v344, 7
        %v346 = vsub.s32 %v343, %v345
        %v347 = vrot.slane %v340, %v346
        %v349 = vunpack.c.l.s4 1966171168
        %v350 = vunpack.c.0.s8 %v349
        %v351 = vlaneseq
        %v352 = vshrl.u32 %v351, 7
        %v353 = vsub.s32 %v350, %v352
        %v354 = vrot.slane %v347, %v353
        %356 = vst.msk [vmem:[#allocation3 + $0x1] sm:$0x3] %vm336, %v354
        %v357 = vld [vmem:[#allocation2] sm:$0x7]
        %v358 = vld [vmem:[#allocation7] ss:$8 sm:$0x3]
        %360 = vrot.lane.b32.xlu0 %v358, 77
        %v361 = vpop.permute.xlu0 %360
        %v362 = vrot.slane %v361, 7
        %vm363 = vcmask 629760
        %v364 = vsel %vm363, %v362, %v361
        %v366 = vmul.f32 %v357, %v364
        %v367 = vld [vmem:[#allocation3] sm:$0x7]
        %s368 = scalar_lea.vmem [#allocation7], 97
        %v369 = vld [vmem:[%s368] ss:$8 sm:$0x3]
        %371 = vrot.lane.b32.xlu0 %v369, 77
        %v372 = vpop.permute.xlu0 %371
        %v373 = vrot.slane %v372, 7
        %v374 = vsel %vm363, %v373, %v372
        %v376 = vmul.f32 %v367, %v374
        %v377 = vadd.f32 %v366, %v376
        %v378 = vadd.f32 %v377, 0.0
        %s379 = scalar_lea.vmem [#allocation7], 1
        %v380 = vld [vmem:[%s379] ss:$8 sm:$0x3]
        %382 = vrot.lane.b32.xlu0 %v380, 78
        %v383 = vpop.permute.xlu0 %382
        %v384 = vrot.slane %v383, 7
        %vm385 = vcmask 637952
        %v386 = vsel %vm385, %v384, %v383
        %v388 = vmul.f32 %v357, %v386
        %s389 = scalar_lea.vmem [#allocation7], 98
        %v390 = vld [vmem:[%s389] ss:$8 sm:$0x3]
        %392 = vrot.lane.b32.xlu0 %v390, 78
        %v393 = vpop.permute.xlu0 %392
        %v394 = vrot.slane %v393, 7
        %v395 = vsel %vm385, %v394, %v393
        %v397 = vmul.f32 %v367, %v395
        %v398 = vadd.f32 %v388, %v397
        %400 = vrot.lane.b32.xlu0 %v398, 127
        %v401 = vpop.permute.xlu0 %400
        %v402 = vrot.slane %v401, 1
        %vm403 = vcmask 1039360
        %v404 = vsel %vm403, %v401, %v402
        %v406 = vadd.f32 %v378, %v404
        %s407 = scalar_lea.vmem [#allocation7], 2
        %v408 = vld [vmem:[%s407] ss:$8 sm:$0x3]
        %410 = vrot.lane.b32.xlu0 %v408, 79
        %v411 = vpop.permute.xlu0 %410
        %v412 = vrot.slane %v411, 7
        %vm413 = vcmask 646144
        %v414 = vsel %vm413, %v412, %v411
        %v416 = vmul.f32 %v357, %v414
        %s417 = scalar_lea.vmem [#allocation7], 99
        %v418 = vld [vmem:[%s417] ss:$8 sm:$0x3]
        %420 = vrot.lane.b32.xlu0 %v418, 79
        %v421 = vpop.permute.xlu0 %420
        %v422 = vrot.slane %v421, 7
        %v423 = vsel %vm413, %v422, %v421
        %v425 = vmul.f32 %v367, %v423
        %v426 = vadd.f32 %v416, %v425
        %428 = vrot.lane.b32.xlu0 %v426, 126
        %v429 = vpop.permute.xlu0 %428
        %v430 = vrot.slane %v429, 1
        %vm431 = vcmask 1031168
        %v432 = vsel %vm431, %v429, %v430
        %v434 = vadd.f32 %v406, %v432
        %s435 = scalar_lea.vmem [#allocation7], 3
        %v436 = vld [vmem:[%s435] ss:$8 sm:$0x3]
        %438 = vrot.lane.b32.xlu0 %v436, 80
        %v439 = vpop.permute.xlu0 %438
        %v440 = vrot.slane %v439, 7
        %vm441 = vcmask 654336
        %v442 = vsel %vm441, %v440, %v439
        %v444 = vmul.f32 %v357, %v442
        %s445 = scalar_lea.vmem [#allocation7], 100
        %v446 = vld [vmem:[%s445] ss:$8 sm:$0x3]
        %448 = vrot.lane.b32.xlu0 %v446, 80
        %v449 = vpop.permute.xlu0 %448
        %v450 = vrot.slane %v449, 7
        %v451 = vsel %vm441, %v450, %v449
        %v453 = vmul.f32 %v367, %v451
        %v454 = vadd.f32 %v444, %v453
        %456 = vrot.lane.b32.xlu0 %v454, 125
        %v457 = vpop.permute.xlu0 %456
        %v458 = vrot.slane %v457, 1
        %vm459 = vcmask 1022976
        %v460 = vsel %vm459, %v457, %v458
        %v462 = vadd.f32 %v434, %v460
        %s463 = scalar_lea.vmem [#allocation7], 4
        %v464 = vld [vmem:[%s463] ss:$8 sm:$0x3]
        %466 = vrot.lane.b32.xlu0 %v464, 81
        %v467 = vpop.permute.xlu0 %466
        %v468 = vrot.slane %v467, 7
        %vm469 = vcmask 662528
        %v470 = vsel %vm469, %v468, %v467
        %v472 = vmul.f32 %v357, %v470
        %s473 = scalar_lea.vmem [#allocation7], 101
        %v474 = vld [vmem:[%s473] ss:$8 sm:$0x3]
        %476 = vrot.lane.b32.xlu0 %v474, 81
        %v477 = vpop.permute.xlu0 %476
        %v478 = vrot.slane %v477, 7
        %v479 = vsel %vm469, %v478, %v477
        %v481 = vmul.f32 %v367, %v479
        %v482 = vadd.f32 %v472, %v481
        %484 = vrot.lane.b32.xlu0 %v482, 124
        %v485 = vpop.permute.xlu0 %484
        %v486 = vrot.slane %v485, 1
        %vm487 = vcmask 1014784
        %v488 = vsel %vm487, %v485, %v486
        %v490 = vadd.f32 %v462, %v488
        %s491 = scalar_lea.vmem [#allocation7], 5
        %v492 = vld [vmem:[%s491] ss:$8 sm:$0x3]
        %494 = vrot.lane.b32.xlu0 %v492, 82
        %v495 = vpop.permute.xlu0 %494
        %v496 = vrot.slane %v495, 7
        %vm497 = vcmask 670720
        %v498 = vsel %vm497, %v496, %v495
        %v500 = vmul.f32 %v357, %v498
        %s501 = scalar_lea.vmem [#allocation7], 102
        %v502 = vld [vmem:[%s501] ss:$8 sm:$0x3]
        %504 = vrot.lane.b32.xlu0 %v502, 82
        %v505 = vpop.permute.xlu0 %504
        %v506 = vrot.slane %v505, 7
        %v507 = vsel %vm497, %v506, %v505
        %v509 = vmul.f32 %v367, %v507
        %v510 = vadd.f32 %v500, %v509
        %512 = vrot.lane.b32.xlu0 %v510, 123
        %v513 = vpop.permute.xlu0 %512
        %v514 = vrot.slane %v513, 1
        %vm515 = vcmask 1006592
        %v516 = vsel %vm515, %v513, %v514
        %v518 = vadd.f32 %v490, %v516
        %s519 = scalar_lea.vmem [#allocation7], 6
        %v520 = vld [vmem:[%s519] ss:$8 sm:$0x3]
        %522 = vrot.lane.b32.xlu0 %v520, 83
        %v523 = vpop.permute.xlu0 %522
        %v524 = vrot.slane %v523, 7
        %vm525 = vcmask 678912
        %v526 = vsel %vm525, %v524, %v523
        %v528 = vmul.f32 %v357, %v526
        %s529 = scalar_lea.vmem [#allocation7], 103
        %v530 = vld [vmem:[%s529] ss:$8 sm:$0x3]
        %532 = vrot.lane.b32.xlu0 %v530, 83
        %v533 = vpop.permute.xlu0 %532
        %v534 = vrot.slane %v533, 7
        %v535 = vsel %vm525, %v534, %v533
        %v537 = vmul.f32 %v367, %v535
        %v538 = vadd.f32 %v528, %v537
        %540 = vrot.lane.b32.xlu0 %v538, 122
        %v541 = vpop.permute.xlu0 %540
        %v542 = vrot.slane %v541, 1
        %vm543 = vcmask 998400
        %v544 = vsel %vm543, %v541, %v542
        %v546 = vadd.f32 %v518, %v544
        %s547 = scalar_lea.vmem [#allocation7], 7
        %v548 = vld [vmem:[%s547] ss:$8 sm:$0x3]
        %550 = vrot.lane.b32.xlu0 %v548, 93
        %v551 = vpop.permute.xlu0 %550
        %v552 = vrot.slane %v551, 7
        %vm553 = vcmask 760832
        %v554 = vsel %vm553, %v552, %v551
        %v556 = vmul.f32 %v357, %v554
        %s557 = scalar_lea.vmem [#allocation7], 112
        %v558 = vld [vmem:[%s557] ss:$8 sm:$0x3]
        %560 = vrot.lane.b32.xlu0 %v558, 93
        %v561 = vpop.permute.xlu0 %560
        %v562 = vrot.slane %v561, 7
        %v563 = vsel %vm553, %v562, %v561
        %v565 = vmul.f32 %v367, %v563
        %v566 = vadd.f32 %v556, %v565
        %568 = vrot.lane.b32.xlu0 %v566, 112
        %v569 = vpop.permute.xlu0 %568
        %v570 = vrot.slane %v569, 1
        %vm571 = vcmask 916480
        %v572 = vsel %vm571, %v569, %v570
        %v574 = vadd.f32 %v546, %v572
        %s575 = scalar_lea.vmem [#allocation7], 16
        %v576 = vld [vmem:[%s575] ss:$8 sm:$0x3]
        %578 = vrot.lane.b32.xlu0 %v576, 94
        %v579 = vpop.permute.xlu0 %578
        %v580 = vrot.slane %v579, 7
        %vm581 = vcmask 769024
        %v582 = vsel %vm581, %v580, %v579
        %v584 = vmul.f32 %v357, %v582
        %s585 = scalar_lea.vmem [#allocation7], 113
        %v586 = vld [vmem:[%s585] ss:$8 sm:$0x3]
        %588 = vrot.lane.b32.xlu0 %v586, 94
        %v589 = vpop.permute.xlu0 %588
        %v590 = vrot.slane %v589, 7
        %v591 = vsel %vm581, %v590, %v589
        %v593 = vmul.f32 %v367, %v591
        %v594 = vadd.f32 %v584, %v593
        %596 = vrot.lane.b32.xlu0 %v594, 111
        %v597 = vpop.permute.xlu0 %596
        %v598 = vrot.slane %v597, 1
        %vm599 = vcmask 908288
        %v600 = vsel %vm599, %v597, %v598
        %v602 = vadd.f32 %v574, %v600
        %s603 = scalar_lea.vmem [#allocation7], 17
        %v604 = vld [vmem:[%s603] ss:$8 sm:$0x3]
        %606 = vrot.lane.b32.xlu0 %v604, 95
        %v607 = vpop.permute.xlu0 %606
        %v608 = vrot.slane %v607, 7
        %vm609 = vcmask 777216
        %v610 = vsel %vm609, %v608, %v607
        %v612 = vmul.f32 %v357, %v610
        %s613 = scalar_lea.vmem [#allocation7], 114
        %v614 = vld [vmem:[%s613] ss:$8 sm:$0x3]
        %616 = vrot.lane.b32.xlu0 %v614, 95
        %v617 = vpop.permute.xlu0 %616
        %v618 = vrot.slane %v617, 7
        %v619 = vsel %vm609, %v618, %v617
        %v621 = vmul.f32 %v367, %v619
        %v622 = vadd.f32 %v612, %v621
        %624 = vrot.lane.b32.xlu0 %v622, 110
        %v625 = vpop.permute.xlu0 %624
        %v626 = vrot.slane %v625, 1
        %vm627 = vcmask 900096
        %v628 = vsel %vm627, %v625, %v626
        %v630 = vadd.f32 %v602, %v628
        %s631 = scalar_lea.vmem [#allocation7], 18
        %v632 = vld [vmem:[%s631] ss:$8 sm:$0x3]
        %634 = vrot.lane.b32.xlu0 %v632, 96
        %v635 = vpop.permute.xlu0 %634
        %v636 = vrot.slane %v635, 7
        %vm637 = vcmask 785408
        %v638 = vsel %vm637, %v636, %v635
        %v640 = vmul.f32 %v357, %v638
        %s641 = scalar_lea.vmem [#allocation7], 115
        %v642 = vld [vmem:[%s641] ss:$8 sm:$0x3]
        %644 = vrot.lane.b32.xlu0 %v642, 96
        %v645 = vpop.permute.xlu0 %644
        %v646 = vrot.slane %v645, 7
        %v647 = vsel %vm637, %v646, %v645
        %v649 = vmul.f32 %v367, %v647
        %v650 = vadd.f32 %v640, %v649
        %652 = vrot.lane.b32.xlu0 %v650, 109
        %v653 = vpop.permute.xlu0 %652
        %v654 = vrot.slane %v653, 1
        %vm655 = vcmask 891904
        %v656 = vsel %vm655, %v653, %v654
        %v658 = vadd.f32 %v630, %v656
        %s659 = scalar_lea.vmem [#allocation7], 19
        %v660 = vld [vmem:[%s659] ss:$8 sm:$0x3]
        %662 = vrot.lane.b32.xlu0 %v660, 97
        %v663 = vpop.permute.xlu0 %662
        %v664 = vrot.slane %v663, 7
        %vm665 = vcmask 793600
        %v666 = vsel %vm665, %v664, %v663
        %v668 = vmul.f32 %v357, %v666
        %s669 = scalar_lea.vmem [#allocation7], 116
        %v670 = vld [vmem:[%s669] ss:$8 sm:$0x3]
        %672 = vrot.lane.b32.xlu0 %v670, 97
        %v673 = vpop.permute.xlu0 %672
        %v674 = vrot.slane %v673, 7
        %v675 = vsel %vm665, %v674, %v673
        %v677 = vmul.f32 %v367, %v675
        %v678 = vadd.f32 %v668, %v677
        %680 = vrot.lane.b32.xlu0 %v678, 108
        %v681 = vpop.permute.xlu0 %680
        %v682 = vrot.slane %v681, 1
        %vm683 = vcmask 883712
        %v684 = vsel %vm683, %v681, %v682
        %v686 = vadd.f32 %v658, %v684
        %s687 = scalar_lea.vmem [#allocation7], 20
        %v688 = vld [vmem:[%s687] ss:$8 sm:$0x3]
        %690 = vrot.lane.b32.xlu0 %v688, 98
        %v691 = vpop.permute.xlu0 %690
        %v692 = vrot.slane %v691, 7
        %vm693 = vcmask 801792
        %v694 = vsel %vm693, %v692, %v691
        %v696 = vmul.f32 %v357, %v694
        %s697 = scalar_lea.vmem [#allocation7], 117
        %v698 = vld [vmem:[%s697] ss:$8 sm:$0x3]
        %700 = vrot.lane.b32.xlu0 %v698, 98
        %v701 = vpop.permute.xlu0 %700
        %v702 = vrot.slane %v701, 7
        %v703 = vsel %vm693, %v702, %v701
        %v705 = vmul.f32 %v367, %v703
        %v706 = vadd.f32 %v696, %v705
        %708 = vrot.lane.b32.xlu0 %v706, 107
        %v709 = vpop.permute.xlu0 %708
        %v710 = vrot.slane %v709, 1
        %vm711 = vcmask 875520
        %v712 = vsel %vm711, %v709, %v710
        %v714 = vadd.f32 %v686, %v712
        %s715 = scalar_lea.vmem [#allocation7], 21
        %v716 = vld [vmem:[%s715] ss:$8 sm:$0x3]
        %718 = vrot.lane.b32.xlu0 %v716, 99
        %v719 = vpop.permute.xlu0 %718
        %v720 = vrot.slane %v719, 7
        %vm721 = vcmask 809984
        %v722 = vsel %vm721, %v720, %v719
        %v724 = vmul.f32 %v357, %v722
        %s725 = scalar_lea.vmem [#allocation7], 118
        %v726 = vld [vmem:[%s725] ss:$8 sm:$0x3]
        %728 = vrot.lane.b32.xlu0 %v726, 99
        %v729 = vpop.permute.xlu0 %728
        %v730 = vrot.slane %v729, 7
        %v731 = vsel %vm721, %v730, %v729
        %v733 = vmul.f32 %v367, %v731
        %v734 = vadd.f32 %v724, %v733
        %736 = vrot.lane.b32.xlu0 %v734, 106
        %v737 = vpop.permute.xlu0 %736
        %v738 = vrot.slane %v737, 1
        %vm739 = vcmask 867328
        %v740 = vsel %vm739, %v737, %v738
        %v742 = vadd.f32 %v714, %v740
        %s743 = scalar_lea.vmem [#allocation7], 22
        %v744 = vld [vmem:[%s743] ss:$8 sm:$0x3]
        %746 = vrot.lane.b32.xlu0 %v744, 109
        %v747 = vpop.permute.xlu0 %746
        %v748 = vrot.slane %v747, 7
        %v749 = vsel %vm655, %v748, %v747
        %v751 = vmul.f32 %v357, %v749
        %s752 = scalar_lea.vmem [#allocation7], 119
        %v753 = vld [vmem:[%s752] ss:$8 sm:$0x3]
        %755 = vrot.lane.b32.xlu0 %v753, 109
        %v756 = vpop.permute.xlu0 %755
        %v757 = vrot.slane %v756, 7
        %v758 = vsel %vm655, %v757, %v756
        %v760 = vmul.f32 %v367, %v758
        %v761 = vadd.f32 %v751, %v760
        %763 = vrot.lane.b32.xlu0 %v761, 96
        %v764 = vpop.permute.xlu0 %763
        %v765 = vrot.slane %v764, 1
        %v766 = vsel %vm637, %v764, %v765
        %v768 = vadd.f32 %v742, %v766
        %s769 = scalar_lea.vmem [#allocation7], 23
        %v770 = vld [vmem:[%s769] ss:$8 sm:$0x3]
        %772 = vrot.lane.b32.xlu0 %v770, 110
        %v773 = vpop.permute.xlu0 %772
        %v774 = vrot.slane %v773, 7
        %v775 = vsel %vm627, %v774, %v773
        %v777 = vmul.f32 %v357, %v775
        %s778 = scalar_lea.vmem [#allocation7], 128
        %v779 = vld [vmem:[%s778] ss:$8 sm:$0x3]
        %781 = vrot.lane.b32.xlu0 %v779, 110
        %v782 = vpop.permute.xlu0 %781
        %v783 = vrot.slane %v782, 7
        %v784 = vsel %vm627, %v783, %v782
        %v786 = vmul.f32 %v367, %v784
        %v787 = vadd.f32 %v777, %v786
        %789 = vrot.lane.b32.xlu0 %v787, 95
        %v790 = vpop.permute.xlu0 %789
        %v791 = vrot.slane %v790, 1
        %v792 = vsel %vm609, %v790, %v791
        %v794 = vadd.f32 %v768, %v792
        %s795 = scalar_lea.vmem [#allocation7], 32
        %v796 = vld [vmem:[%s795] ss:$8 sm:$0x3]
        %798 = vrot.lane.b32.xlu0 %v796, 111
        %v799 = vpop.permute.xlu0 %798
        %v800 = vrot.slane %v799, 7
        %v801 = vsel %vm599, %v800, %v799
        %v803 = vmul.f32 %v357, %v801
        %s804 = scalar_lea.vmem [#allocation7], 129
        %v805 = vld [vmem:[%s804] ss:$8 sm:$0x3]
        %807 = vrot.lane.b32.xlu0 %v805, 111
        %v808 = vpop.permute.xlu0 %807
        %v809 = vrot.slane %v808, 7
        %v810 = vsel %vm599, %v809, %v808
        %v812 = vmul.f32 %v367, %v810
        %v813 = vadd.f32 %v803, %v812
        %815 = vrot.lane.b32.xlu0 %v813, 94
        %v816 = vpop.permute.xlu0 %815
        %v817 = vrot.slane %v816, 1
        %v818 = vsel %vm581, %v816, %v817
        %v820 = vadd.f32 %v794, %v818
        %s821 = scalar_lea.vmem [#allocation7], 33
        %v822 = vld [vmem:[%s821] ss:$8 sm:$0x3]
        %824 = vrot.lane.b32.xlu0 %v822, 112
        %v825 = vpop.permute.xlu0 %824
        %v826 = vrot.slane %v825, 7
        %v827 = vsel %vm571, %v826, %v825
        %v829 = vmul.f32 %v357, %v827
        %s830 = scalar_lea.vmem [#allocation7], 130
        %v831 = vld [vmem:[%s830] ss:$8 sm:$0x3]
        %833 = vrot.lane.b32.xlu0 %v831, 112
        %v834 = vpop.permute.xlu0 %833
        %v835 = vrot.slane %v834, 7
        %v836 = vsel %vm571, %v835, %v834
        %v838 = vmul.f32 %v367, %v836
        %v839 = vadd.f32 %v829, %v838
        %841 = vrot.lane.b32.xlu0 %v839, 93
        %v842 = vpop.permute.xlu0 %841
        %v843 = vrot.slane %v842, 1
        %v844 = vsel %vm553, %v842, %v843
        %v846 = vadd.f32 %v820, %v844
        %s847 = scalar_lea.vmem [#allocation7], 34
        %v848 = vld [vmem:[%s847] ss:$8 sm:$0x3]
        %850 = vrot.lane.b32.xlu0 %v848, 113
        %v851 = vpop.permute.xlu0 %850
        %v852 = vrot.slane %v851, 7
        %vm853 = vcmask 924672
        %v854 = vsel %vm853, %v852, %v851
        %v856 = vmul.f32 %v357, %v854
        %s857 = scalar_lea.vmem [#allocation7], 131
        %v858 = vld [vmem:[%s857] ss:$8 sm:$0x3]
        %860 = vrot.lane.b32.xlu0 %v858, 113
        %v861 = vpop.permute.xlu0 %860
        %v862 = vrot.slane %v861, 7
        %v863 = vsel %vm853, %v862, %v861
        %v865 = vmul.f32 %v367, %v863
        %v866 = vadd.f32 %v856, %v865
        %868 = vrot.lane.b32.xlu0 %v866, 92
        %v869 = vpop.permute.xlu0 %868
        %v870 = vrot.slane %v869, 1
        %vm871 = vcmask 752640
        %v872 = vsel %vm871, %v869, %v870
        %v874 = vadd.f32 %v846, %v872
        %s875 = scalar_lea.vmem [#allocation7], 35
        %v876 = vld [vmem:[%s875] ss:$8 sm:$0x3]
        %878 = vrot.lane.b32.xlu0 %v876, 114
        %v879 = vpop.permute.xlu0 %878
        %v880 = vrot.slane %v879, 7
        %vm881 = vcmask 932864
        %v882 = vsel %vm881, %v880, %v879
        %v884 = vmul.f32 %v357, %v882
        %s885 = scalar_lea.vmem [#allocation7], 132
        %v886 = vld [vmem:[%s885] ss:$8 sm:$0x3]
        %888 = vrot.lane.b32.xlu0 %v886, 114
        %v889 = vpop.permute.xlu0 %888
        %v890 = vrot.slane %v889, 7
        %v891 = vsel %vm881, %v890, %v889
        %v893 = vmul.f32 %v367, %v891
        %v894 = vadd.f32 %v884, %v893
        %896 = vrot.lane.b32.xlu0 %v894, 91
        %v897 = vpop.permute.xlu0 %896
        %v898 = vrot.slane %v897, 1
        %vm899 = vcmask 744448
        %v900 = vsel %vm899, %v897, %v898
        %v902 = vadd.f32 %v874, %v900
        %s903 = scalar_lea.vmem [#allocation7], 36
        %v904 = vld [vmem:[%s903] ss:$8 sm:$0x3]
        %906 = vrot.lane.b32.xlu0 %v904, 115
        %v907 = vpop.permute.xlu0 %906
        %v908 = vrot.slane %v907, 7
        %vm909 = vcmask 941056
        %v910 = vsel %vm909, %v908, %v907
        %v912 = vmul.f32 %v357, %v910
        %s913 = scalar_lea.vmem [#allocation7], 133
        %v914 = vld [vmem:[%s913] ss:$8 sm:$0x3]
        %916 = vrot.lane.b32.xlu0 %v914, 115
        %v917 = vpop.permute.xlu0 %916
        %v918 = vrot.slane %v917, 7
        %v919 = vsel %vm909, %v918, %v917
        %v921 = vmul.f32 %v367, %v919
        %v922 = vadd.f32 %v912, %v921
        %924 = vrot.lane.b32.xlu0 %v922, 90
        %v925 = vpop.permute.xlu0 %924
        %v926 = vrot.slane %v925, 1
        %vm927 = vcmask 736256
        %v928 = vsel %vm927, %v925, %v926
        %v930 = vadd.f32 %v902, %v928
        %s931 = scalar_lea.vmem [#allocation7], 37
        %v932 = vld [vmem:[%s931] ss:$8 sm:$0x3]
        %934 = vrot.lane.b32.xlu0 %v932, 125
        %v935 = vpop.permute.xlu0 %934
        %v936 = vrot.slane %v935, 7
        %v937 = vsel %vm459, %v936, %v935
        %v939 = vmul.f32 %v357, %v937
        %s940 = scalar_lea.vmem [#allocation7], 134
        %v941 = vld [vmem:[%s940] ss:$8 sm:$0x3]
        %943 = vrot.lane.b32.xlu0 %v941, 125
        %v944 = vpop.permute.xlu0 %943
        %v945 = vrot.slane %v944, 7
        %v946 = vsel %vm459, %v945, %v944
        %v948 = vmul.f32 %v367, %v946
        %v949 = vadd.f32 %v939, %v948
        %951 = vrot.lane.b32.xlu0 %v949, 80
        %v952 = vpop.permute.xlu0 %951
        %v953 = vrot.slane %v952, 1
        %v954 = vsel %vm441, %v952, %v953
        %v956 = vadd.f32 %v930, %v954
        %s957 = scalar_lea.vmem [#allocation7], 38
        %v958 = vld [vmem:[%s957] ss:$8 sm:$0x3]
        %960 = vrot.lane.b32.xlu0 %v958, 126
        %v961 = vpop.permute.xlu0 %960
        %v962 = vrot.slane %v961, 7
        %v963 = vsel %vm431, %v962, %v961
        %v965 = vmul.f32 %v357, %v963
        %s966 = scalar_lea.vmem [#allocation7], 135
        %v967 = vld [vmem:[%s966] ss:$8 sm:$0x3]
        %969 = vrot.lane.b32.xlu0 %v967, 126
        %v970 = vpop.permute.xlu0 %969
        %v971 = vrot.slane %v970, 7
        %v972 = vsel %vm431, %v971, %v970
        %v974 = vmul.f32 %v367, %v972
        %v975 = vadd.f32 %v965, %v974
        %977 = vrot.lane.b32.xlu0 %v975, 79
        %v978 = vpop.permute.xlu0 %977
        %v979 = vrot.slane %v978, 1
        %v980 = vsel %vm413, %v978, %v979
        %v982 = vadd.f32 %v956, %v980
        %s983 = scalar_lea.vmem [#allocation7], 39
        %v984 = vld [vmem:[%s983] ss:$8 sm:$0x3]
        %986 = vrot.lane.b32.xlu0 %v984, 127
        %v987 = vpop.permute.xlu0 %986
        %v988 = vrot.slane %v987, 7
        %v989 = vsel %vm403, %v988, %v987
        %v991 = vmul.f32 %v357, %v989
        %s992 = scalar_lea.vmem [#allocation7], 144
        %v993 = vld [vmem:[%s992] ss:$8 sm:$0x3]
        %995 = vrot.lane.b32.xlu0 %v993, 127
        %v996 = vpop.permute.xlu0 %995
        %v997 = vrot.slane %v996, 7
        %v998 = vsel %vm403, %v997, %v996
        %v1000 = vmul.f32 %v367, %v998
        %v1001 = vadd.f32 %v991, %v1000
        %1003 = vrot.lane.b32.xlu0 %v1001, 78
        %v1004 = vpop.permute.xlu0 %1003
        %v1005 = vrot.slane %v1004, 1
        %v1006 = vsel %vm385, %v1004, %v1005
        %v1008 = vadd.f32 %v982, %v1006
        %v1009 = vld [vmem:[#allocation2 + $0x1] sm:$0x3]
        %s1010 = scalar_lea.vmem [#allocation7], 48
        %v1011 = vld [vmem:[%s1010] ss:$8 sm:$0x3]
        %v1012 = vmul.f32 %v1009, %v1011
        %v1013 = vld [vmem:[#allocation3 + $0x1] sm:$0x3]
        %s1014 = scalar_lea.vmem [#allocation7], 145
        %v1015 = vld [vmem:[%s1014] ss:$8 sm:$0x3]
        %v1016 = vmul.f32 %v1013, %v1015
        %v1017 = vadd.f32 %v1012, %v1016
        %1019 = vrot.lane.b32.xlu0 %v1017, 77
        %v1020 = vpop.permute.xlu0 %1019
        %v1021 = vrot.slane %v1020, 7
        %v1022 = vsel %vm363, %v1021, %v1020
        %v1024 = vadd.f32 %v1008, %v1022
        %v1025 = vld [vmem:[#allocation2 + $0x1] sm:$0x7]
        %s1026 = scalar_lea.vmem [#allocation7], 49
        %v1027 = vld [vmem:[%s1026] ss:$8 sm:$0x3]
        %1029 = vrot.lane.b32.xlu0 %v1027, 1
        %v1030 = vpop.permute.xlu0 %1029
        %v1031 = vrot.slane %v1030, 7
        %vm1032 = vcmask 7168
        %v1033 = vsel %vm1032, %v1031, %v1030
        %v1035 = vmul.f32 %v1025, %v1033
        %v1036 = vld [vmem:[#allocation3 + $0x1] sm:$0x7]
        %s1037 = scalar_lea.vmem [#allocation7], 146
        %v1038 = vld [vmem:[%s1037] ss:$8 sm:$0x3]
        %1040 = vrot.lane.b32.xlu0 %v1038, 1
        %v1041 = vpop.permute.xlu0 %1040
        %v1042 = vrot.slane %v1041, 7
        %v1043 = vsel %vm1032, %v1042, %v1041
        %v1045 = vmul.f32 %v1036, %v1043
        %v1046 = vadd.f32 %v1035, %v1045
        %1048 = vrot.lane.b32.xlu0 %v1046, 76
        %v1049 = vpop.permute.xlu0 %1048
        %v1050 = vrot.slane %v1049, 7
        %vm1051 = vcmask 621568
        %v1052 = vsel %vm1051, %v1050, %v1049
        %v1054 = vadd.f32 %v1024, %v1052
        %s1055 = scalar_lea.vmem [#allocation7], 50
        %v1056 = vld [vmem:[%s1055] ss:$8 sm:$0x3]
        %1058 = vrot.lane.b32.xlu0 %v1056, 2
        %v1059 = vpop.permute.xlu0 %1058
        %v1060 = vrot.slane %v1059, 7
        %vm1061 = vcmask 15360
        %v1062 = vsel %vm1061, %v1060, %v1059
        %v1064 = vmul.f32 %v1025, %v1062
        %s1065 = scalar_lea.vmem [#allocation7], 147
        %v1066 = vld [vmem:[%s1065] ss:$8 sm:$0x3]
        %1068 = vrot.lane.b32.xlu0 %v1066, 2
        %v1069 = vpop.permute.xlu0 %1068
        %v1070 = vrot.slane %v1069, 7
        %v1071 = vsel %vm1061, %v1070, %v1069
        %v1073 = vmul.f32 %v1036, %v1071
        %v1074 = vadd.f32 %v1064, %v1073
        %1076 = vrot.lane.b32.xlu0 %v1074, 75
        %v1077 = vpop.permute.xlu0 %1076
        %v1078 = vrot.slane %v1077, 7
        %vm1079 = vcmask 613376
        %v1080 = vsel %vm1079, %v1078, %v1077
        %v1082 = vadd.f32 %v1054, %v1080
        %s1083 = scalar_lea.vmem [#allocation7], 51
        %v1084 = vld [vmem:[%s1083] ss:$8 sm:$0x3]
        %1086 = vrot.lane.b32.xlu0 %v1084, 3
        %v1087 = vpop.permute.xlu0 %1086
        %v1088 = vrot.slane %v1087, 7
        %vm1089 = vcmask 23552
        %v1090 = vsel %vm1089, %v1088, %v1087
        %v1092 = vmul.f32 %v1025, %v1090
        %s1093 = scalar_lea.vmem [#allocation7], 148
        %v1094 = vld [vmem:[%s1093] ss:$8 sm:$0x3]
        %1096 = vrot.lane.b32.xlu0 %v1094, 3
        %v1097 = vpop.permute.xlu0 %1096
        %v1098 = vrot.slane %v1097, 7
        %v1099 = vsel %vm1089, %v1098, %v1097
        %v1101 = vmul.f32 %v1036, %v1099
        %v1102 = vadd.f32 %v1092, %v1101
        %1104 = vrot.lane.b32.xlu0 %v1102, 74
        %v1105 = vpop.permute.xlu0 %1104
        %v1106 = vrot.slane %v1105, 7
        %vm1107 = vcmask 605184
        %v1108 = vsel %vm1107, %v1106, %v1105
        %v1110 = vadd.f32 %v1082, %v1108
        %s1111 = scalar_lea.vmem [#allocation7], 52
        %v1112 = vld [vmem:[%s1111] ss:$8 sm:$0x3]
        %1114 = vrot.lane.b32.xlu0 %v1112, 13
        %v1115 = vpop.permute.xlu0 %1114
        %v1116 = vrot.slane %v1115, 7
        %vm1117 = vcmask 105472
        %v1118 = vsel %vm1117, %v1116, %v1115
        %v1120 = vmul.f32 %v1025, %v1118
        %s1121 = scalar_lea.vmem [#allocation7], 149
        %v1122 = vld [vmem:[%s1121] ss:$8 sm:$0x3]
        %1124 = vrot.lane.b32.xlu0 %v1122, 13
        %v1125 = vpop.permute.xlu0 %1124
        %v1126 = vrot.slane %v1125, 7
        %v1127 = vsel %vm1117, %v1126, %v1125
        %v1129 = vmul.f32 %v1036, %v1127
        %v1130 = vadd.f32 %v1120, %v1129
        %1132 = vrot.lane.b32.xlu0 %v1130, 64
        %v1133 = vpop.permute.xlu0 %1132
        %v1134 = vrot.slane %v1133, 7
        %vm1135 = vcmask 523264
        %v1136 = vsel %vm1135, %v1134, %v1133
        %v1138 = vadd.f32 %v1110, %v1136
        %s1139 = scalar_lea.vmem [#allocation7], 53
        %v1140 = vld [vmem:[%s1139] ss:$8 sm:$0x3]
        %1142 = vrot.lane.b32.xlu0 %v1140, 14
        %v1143 = vpop.permute.xlu0 %1142
        %v1144 = vrot.slane %v1143, 7
        %vm1145 = vcmask 113664
        %v1146 = vsel %vm1145, %v1144, %v1143
        %v1148 = vmul.f32 %v1025, %v1146
        %s1149 = scalar_lea.vmem [#allocation7], 150
        %v1150 = vld [vmem:[%s1149] ss:$8 sm:$0x3]
        %1152 = vrot.lane.b32.xlu0 %v1150, 14
        %v1153 = vpop.permute.xlu0 %1152
        %v1154 = vrot.slane %v1153, 7
        %v1155 = vsel %vm1145, %v1154, %v1153
        %v1157 = vmul.f32 %v1036, %v1155
        %v1158 = vadd.f32 %v1148, %v1157
        %1160 = vrot.lane.b32.xlu0 %v1158, 63
        %v1161 = vpop.permute.xlu0 %1160
        %v1162 = vrot.slane %v1161, 7
        %vm1163 = vcmask 515072
        %v1164 = vsel %vm1163, %v1162, %v1161
        %v1166 = vadd.f32 %v1138, %v1164
        %s1167 = scalar_lea.vmem [#allocation7], 54
        %v1168 = vld [vmem:[%s1167] ss:$8 sm:$0x3]
        %1170 = vrot.lane.b32.xlu0 %v1168, 15
        %v1171 = vpop.permute.xlu0 %1170
        %v1172 = vrot.slane %v1171, 7
        %vm1173 = vcmask 121856
        %v1174 = vsel %vm1173, %v1172, %v1171
        %v1176 = vmul.f32 %v1025, %v1174
        %s1177 = scalar_lea.vmem [#allocation7], 151
        %v1178 = vld [vmem:[%s1177] ss:$8 sm:$0x3]
        %1180 = vrot.lane.b32.xlu0 %v1178, 15
        %v1181 = vpop.permute.xlu0 %1180
        %v1182 = vrot.slane %v1181, 7
        %v1183 = vsel %vm1173, %v1182, %v1181
        %v1185 = vmul.f32 %v1036, %v1183
        %v1186 = vadd.f32 %v1176, %v1185
        %1188 = vrot.lane.b32.xlu0 %v1186, 62
        %v1189 = vpop.permute.xlu0 %1188
        %v1190 = vrot.slane %v1189, 7
        %vm1191 = vcmask 506880
        %v1192 = vsel %vm1191, %v1190, %v1189
        %v1194 = vadd.f32 %v1166, %v1192
        %s1195 = scalar_lea.vmem [#allocation7], 55
        %v1196 = vld [vmem:[%s1195] ss:$8 sm:$0x3]
        %1198 = vrot.lane.b32.xlu0 %v1196, 16
        %v1199 = vpop.permute.xlu0 %1198
        %v1200 = vrot.slane %v1199, 7
        %vm1201 = vcmask 130048
        %v1202 = vsel %vm1201, %v1200, %v1199
        %v1204 = vmul.f32 %v1025, %v1202
        %s1205 = scalar_lea.vmem [#allocation7], 160
        %v1206 = vld [vmem:[%s1205] ss:$8 sm:$0x3]
        %1208 = vrot.lane.b32.xlu0 %v1206, 16
        %v1209 = vpop.permute.xlu0 %1208
        %v1210 = vrot.slane %v1209, 7
        %v1211 = vsel %vm1201, %v1210, %v1209
        %v1213 = vmul.f32 %v1036, %v1211
        %v1214 = vadd.f32 %v1204, %v1213
        %1216 = vrot.lane.b32.xlu0 %v1214, 61
        %v1217 = vpop.permute.xlu0 %1216
        %v1218 = vrot.slane %v1217, 7
        %vm1219 = vcmask 498688
        %v1220 = vsel %vm1219, %v1218, %v1217
        %v1222 = vadd.f32 %v1194, %v1220
        %s1223 = scalar_lea.vmem [#allocation7], 64
        %v1224 = vld [vmem:[%s1223] ss:$8 sm:$0x3]
        %1226 = vrot.lane.b32.xlu0 %v1224, 17
        %v1227 = vpop.permute.xlu0 %1226
        %v1228 = vrot.slane %v1227, 7
        %vm1229 = vcmask 138240
        %v1230 = vsel %vm1229, %v1228, %v1227
        %v1232 = vmul.f32 %v1025, %v1230
        %s1233 = scalar_lea.vmem [#allocation7], 161
        %v1234 = vld [vmem:[%s1233] ss:$8 sm:$0x3]
        %1236 = vrot.lane.b32.xlu0 %v1234, 17
        %v1237 = vpop.permute.xlu0 %1236
        %v1238 = vrot.slane %v1237, 7
        %v1239 = vsel %vm1229, %v1238, %v1237
        %v1241 = vmul.f32 %v1036, %v1239
        %v1242 = vadd.f32 %v1232, %v1241
        %1244 = vrot.lane.b32.xlu0 %v1242, 60
        %v1245 = vpop.permute.xlu0 %1244
        %v1246 = vrot.slane %v1245, 7
        %vm1247 = vcmask 490496
        %v1248 = vsel %vm1247, %v1246, %v1245
        %v1250 = vadd.f32 %v1222, %v1248
        %s1251 = scalar_lea.vmem [#allocation7], 65
        %v1252 = vld [vmem:[%s1251] ss:$8 sm:$0x3]
        %1254 = vrot.lane.b32.xlu0 %v1252, 18
        %v1255 = vpop.permute.xlu0 %1254
        %v1256 = vrot.slane %v1255, 7
        %vm1257 = vcmask 146432
        %v1258 = vsel %vm1257, %v1256, %v1255
        %v1260 = vmul.f32 %v1025, %v1258
        %s1261 = scalar_lea.vmem [#allocation7], 162
        %v1262 = vld [vmem:[%s1261] ss:$8 sm:$0x3]
        %1264 = vrot.lane.b32.xlu0 %v1262, 18
        %v1265 = vpop.permute.xlu0 %1264
        %v1266 = vrot.slane %v1265, 7
        %v1267 = vsel %vm1257, %v1266, %v1265
        %v1269 = vmul.f32 %v1036, %v1267
        %v1270 = vadd.f32 %v1260, %v1269
        %1272 = vrot.lane.b32.xlu0 %v1270, 59
        %v1273 = vpop.permute.xlu0 %1272
        %v1274 = vrot.slane %v1273, 7
        %vm1275 = vcmask 482304
        %v1276 = vsel %vm1275, %v1274, %v1273
        %v1278 = vadd.f32 %v1250, %v1276
        %s1279 = scalar_lea.vmem [#allocation7], 66
        %v1280 = vld [vmem:[%s1279] ss:$8 sm:$0x3]
        %1282 = vrot.lane.b32.xlu0 %v1280, 19
        %v1283 = vpop.permute.xlu0 %1282
        %v1284 = vrot.slane %v1283, 7
        %vm1285 = vcmask 154624
        %v1286 = vsel %vm1285, %v1284, %v1283
        %v1288 = vmul.f32 %v1025, %v1286
        %s1289 = scalar_lea.vmem [#allocation7], 163
        %v1290 = vld [vmem:[%s1289] ss:$8 sm:$0x3]
        %1292 = vrot.lane.b32.xlu0 %v1290, 19
        %v1293 = vpop.permute.xlu0 %1292
        %v1294 = vrot.slane %v1293, 7
        %v1295 = vsel %vm1285, %v1294, %v1293
        %v1297 = vmul.f32 %v1036, %v1295
        %v1298 = vadd.f32 %v1288, %v1297
        %1300 = vrot.lane.b32.xlu0 %v1298, 58
        %v1301 = vpop.permute.xlu0 %1300
        %v1302 = vrot.slane %v1301, 7
        %vm1303 = vcmask 474112
        %v1304 = vsel %vm1303, %v1302, %v1301
        %v1306 = vadd.f32 %v1278, %v1304
        %s1307 = scalar_lea.vmem [#allocation7], 67
        %v1308 = vld [vmem:[%s1307] ss:$8 sm:$0x3]
        %1310 = vrot.lane.b32.xlu0 %v1308, 29
        %v1311 = vpop.permute.xlu0 %1310
        %v1312 = vrot.slane %v1311, 7
        %vm1313 = vcmask 236544
        %v1314 = vsel %vm1313, %v1312, %v1311
        %v1316 = vmul.f32 %v1025, %v1314
        %s1317 = scalar_lea.vmem [#allocation7], 164
        %v1318 = vld [vmem:[%s1317] ss:$8 sm:$0x3]
        %1320 = vrot.lane.b32.xlu0 %v1318, 29
        %v1321 = vpop.permute.xlu0 %1320
        %v1322 = vrot.slane %v1321, 7
        %v1323 = vsel %vm1313, %v1322, %v1321
        %v1325 = vmul.f32 %v1036, %v1323
        %v1326 = vadd.f32 %v1316, %v1325
        %1328 = vrot.lane.b32.xlu0 %v1326, 48
        %v1329 = vpop.permute.xlu0 %1328
        %v1330 = vrot.slane %v1329, 7
        %vm1331 = vcmask 392192
        %v1332 = vsel %vm1331, %v1330, %v1329
        %v1334 = vadd.f32 %v1306, %v1332
        %s1335 = scalar_lea.vmem [#allocation7], 68
        %v1336 = vld [vmem:[%s1335] ss:$8 sm:$0x3]
        %1338 = vrot.lane.b32.xlu0 %v1336, 30
        %v1339 = vpop.permute.xlu0 %1338
        %v1340 = vrot.slane %v1339, 7
        %vm1341 = vcmask 244736
        %v1342 = vsel %vm1341, %v1340, %v1339
        %v1344 = vmul.f32 %v1025, %v1342
        %s1345 = scalar_lea.vmem [#allocation7], 165
        %v1346 = vld [vmem:[%s1345] ss:$8 sm:$0x3]
        %1348 = vrot.lane.b32.xlu0 %v1346, 30
        %v1349 = vpop.permute.xlu0 %1348
        %v1350 = vrot.slane %v1349, 7
        %v1351 = vsel %vm1341, %v1350, %v1349
        %v1353 = vmul.f32 %v1036, %v1351
        %v1354 = vadd.f32 %v1344, %v1353
        %1356 = vrot.lane.b32.xlu0 %v1354, 47
        %v1357 = vpop.permute.xlu0 %1356
        %v1358 = vrot.slane %v1357, 7
        %vm1359 = vcmask 384000
        %v1360 = vsel %vm1359, %v1358, %v1357
        %v1362 = vadd.f32 %v1334, %v1360
        %s1363 = scalar_lea.vmem [#allocation7], 69
        %v1364 = vld [vmem:[%s1363] ss:$8 sm:$0x3]
        %1366 = vrot.lane.b32.xlu0 %v1364, 31
        %v1367 = vpop.permute.xlu0 %1366
        %v1368 = vrot.slane %v1367, 7
        %vm1369 = vcmask 252928
        %v1370 = vsel %vm1369, %v1368, %v1367
        %v1372 = vmul.f32 %v1025, %v1370
        %s1373 = scalar_lea.vmem [#allocation7], 166
        %v1374 = vld [vmem:[%s1373] ss:$8 sm:$0x3]
        %1376 = vrot.lane.b32.xlu0 %v1374, 31
        %v1377 = vpop.permute.xlu0 %1376
        %v1378 = vrot.slane %v1377, 7
        %v1379 = vsel %vm1369, %v1378, %v1377
        %v1381 = vmul.f32 %v1036, %v1379
        %v1382 = vadd.f32 %v1372, %v1381
        %1384 = vrot.lane.b32.xlu0 %v1382, 46
        %v1385 = vpop.permute.xlu0 %1384
        %v1386 = vrot.slane %v1385, 7
        %vm1387 = vcmask 375808
        %v1388 = vsel %vm1387, %v1386, %v1385
        %v1390 = vadd.f32 %v1362, %v1388
        %s1391 = scalar_lea.vmem [#allocation7], 70
        %v1392 = vld [vmem:[%s1391] ss:$8 sm:$0x3]
        %1394 = vrot.lane.b32.xlu0 %v1392, 32
        %v1395 = vpop.permute.xlu0 %1394
        %v1396 = vrot.slane %v1395, 7
        %vm1397 = vcmask 261120
        %v1398 = vsel %vm1397, %v1396, %v1395
        %v1400 = vmul.f32 %v1025, %v1398
        %s1401 = scalar_lea.vmem [#allocation7], 167
        %v1402 = vld [vmem:[%s1401] ss:$8 sm:$0x3]
        %1404 = vrot.lane.b32.xlu0 %v1402, 32
        %v1405 = vpop.permute.xlu0 %1404
        %v1406 = vrot.slane %v1405, 7
        %v1407 = vsel %vm1397, %v1406, %v1405
        %v1409 = vmul.f32 %v1036, %v1407
        %v1410 = vadd.f32 %v1400, %v1409
        %1412 = vrot.lane.b32.xlu0 %v1410, 45
        %v1413 = vpop.permute.xlu0 %1412
        %v1414 = vrot.slane %v1413, 7
        %vm1415 = vcmask 367616
        %v1416 = vsel %vm1415, %v1414, %v1413
        %v1418 = vadd.f32 %v1390, %v1416
        %s1419 = scalar_lea.vmem [#allocation7], 71
        %v1420 = vld [vmem:[%s1419] ss:$8 sm:$0x3]
        %1422 = vrot.lane.b32.xlu0 %v1420, 33
        %v1423 = vpop.permute.xlu0 %1422
        %v1424 = vrot.slane %v1423, 7
        %vm1425 = vcmask 269312
        %v1426 = vsel %vm1425, %v1424, %v1423
        %v1428 = vmul.f32 %v1025, %v1426
        %s1429 = scalar_lea.vmem [#allocation7], 176
        %v1430 = vld [vmem:[%s1429] ss:$8 sm:$0x3]
        %1432 = vrot.lane.b32.xlu0 %v1430, 33
        %v1433 = vpop.permute.xlu0 %1432
        %v1434 = vrot.slane %v1433, 7
        %v1435 = vsel %vm1425, %v1434, %v1433
        %v1437 = vmul.f32 %v1036, %v1435
        %v1438 = vadd.f32 %v1428, %v1437
        %1440 = vrot.lane.b32.xlu0 %v1438, 44
        %v1441 = vpop.permute.xlu0 %1440
        %v1442 = vrot.slane %v1441, 7
        %vm1443 = vcmask 359424
        %v1444 = vsel %vm1443, %v1442, %v1441
        %v1446 = vadd.f32 %v1418, %v1444
        %s1447 = scalar_lea.vmem [#allocation7], 80
        %v1448 = vld [vmem:[%s1447] ss:$8 sm:$0x3]
        %1450 = vrot.lane.b32.xlu0 %v1448, 34
        %v1451 = vpop.permute.xlu0 %1450
        %v1452 = vrot.slane %v1451, 7
        %vm1453 = vcmask 277504
        %v1454 = vsel %vm1453, %v1452, %v1451
        %v1456 = vmul.f32 %v1025, %v1454
        %s1457 = scalar_lea.vmem [#allocation7], 177
        %v1458 = vld [vmem:[%s1457] ss:$8 sm:$0x3]
        %1460 = vrot.lane.b32.xlu0 %v1458, 34
        %v1461 = vpop.permute.xlu0 %1460
        %v1462 = vrot.slane %v1461, 7
        %v1463 = vsel %vm1453, %v1462, %v1461
        %v1465 = vmul.f32 %v1036, %v1463
        %v1466 = vadd.f32 %v1456, %v1465
        %1468 = vrot.lane.b32.xlu0 %v1466, 43
        %v1469 = vpop.permute.xlu0 %1468
        %v1470 = vrot.slane %v1469, 7
        %vm1471 = vcmask 351232
        %v1472 = vsel %vm1471, %v1470, %v1469
        %v1474 = vadd.f32 %v1446, %v1472
        %s1475 = scalar_lea.vmem [#allocation7], 81
        %v1476 = vld [vmem:[%s1475] ss:$8 sm:$0x3]
        %1478 = vrot.lane.b32.xlu0 %v1476, 35
        %v1479 = vpop.permute.xlu0 %1478
        %v1480 = vrot.slane %v1479, 7
        %vm1481 = vcmask 285696
        %v1482 = vsel %vm1481, %v1480, %v1479
        %v1484 = vmul.f32 %v1025, %v1482
        %s1485 = scalar_lea.vmem [#allocation7], 178
        %v1486 = vld [vmem:[%s1485] ss:$8 sm:$0x3]
        %1488 = vrot.lane.b32.xlu0 %v1486, 35
        %v1489 = vpop.permute.xlu0 %1488
        %v1490 = vrot.slane %v1489, 7
        %v1491 = vsel %vm1481, %v1490, %v1489
        %v1493 = vmul.f32 %v1036, %v1491
        %v1494 = vadd.f32 %v1484, %v1493
        %1496 = vrot.lane.b32.xlu0 %v1494, 42
        %v1497 = vpop.permute.xlu0 %1496
        %v1498 = vrot.slane %v1497, 7
        %vm1499 = vcmask 343040
        %v1500 = vsel %vm1499, %v1498, %v1497
        %v1502 = vadd.f32 %v1474, %v1500
        %s1503 = scalar_lea.vmem [#allocation7], 82
        %v1504 = vld [vmem:[%s1503] ss:$8 sm:$0x3]
        %1506 = vrot.lane.b32.xlu0 %v1504, 45
        %v1507 = vpop.permute.xlu0 %1506
        %v1508 = vrot.slane %v1507, 7
        %v1509 = vsel %vm1415, %v1508, %v1507
        %v1511 = vmul.f32 %v1025, %v1509
        %s1512 = scalar_lea.vmem [#allocation7], 179
        %v1513 = vld [vmem:[%s1512] ss:$8 sm:$0x3]
        %1515 = vrot.lane.b32.xlu0 %v1513, 45
        %v1516 = vpop.permute.xlu0 %1515
        %v1517 = vrot.slane %v1516, 7
        %v1518 = vsel %vm1415, %v1517, %v1516
        %v1520 = vmul.f32 %v1036, %v1518
        %v1521 = vadd.f32 %v1511, %v1520
        %1523 = vrot.lane.b32.xlu0 %v1521, 32
        %v1524 = vpop.permute.xlu0 %1523
        %v1525 = vrot.slane %v1524, 7
        %v1526 = vsel %vm1397, %v1525, %v1524
        %v1528 = vadd.f32 %v1502, %v1526
        %s1529 = scalar_lea.vmem [#allocation7], 83
        %v1530 = vld [vmem:[%s1529] ss:$8 sm:$0x3]
        %1532 = vrot.lane.b32.xlu0 %v1530, 46
        %v1533 = vpop.permute.xlu0 %1532
        %v1534 = vrot.slane %v1533, 7
        %v1535 = vsel %vm1387, %v1534, %v1533
        %v1537 = vmul.f32 %v1025, %v1535
        %s1538 = scalar_lea.vmem [#allocation7], 180
        %v1539 = vld [vmem:[%s1538] ss:$8 sm:$0x3]
        %1541 = vrot.lane.b32.xlu0 %v1539, 46
        %v1542 = vpop.permute.xlu0 %1541
        %v1543 = vrot.slane %v1542, 7
        %v1544 = vsel %vm1387, %v1543, %v1542
        %v1546 = vmul.f32 %v1036, %v1544
        %v1547 = vadd.f32 %v1537, %v1546
        %1549 = vrot.lane.b32.xlu0 %v1547, 31
        %v1550 = vpop.permute.xlu0 %1549
        %v1551 = vrot.slane %v1550, 7
        %v1552 = vsel %vm1369, %v1551, %v1550
        %v1554 = vadd.f32 %v1528, %v1552
        %s1555 = scalar_lea.vmem [#allocation7], 84
        %v1556 = vld [vmem:[%s1555] ss:$8 sm:$0x3]
        %1558 = vrot.lane.b32.xlu0 %v1556, 47
        %v1559 = vpop.permute.xlu0 %1558
        %v1560 = vrot.slane %v1559, 7
        %v1561 = vsel %vm1359, %v1560, %v1559
        %v1563 = vmul.f32 %v1025, %v1561
        %s1564 = scalar_lea.vmem [#allocation7], 181
        %v1565 = vld [vmem:[%s1564] ss:$8 sm:$0x3]
        %1567 = vrot.lane.b32.xlu0 %v1565, 47
        %v1568 = vpop.permute.xlu0 %1567
        %v1569 = vrot.slane %v1568, 7
        %v1570 = vsel %vm1359, %v1569, %v1568
        %v1572 = vmul.f32 %v1036, %v1570
        %v1573 = vadd.f32 %v1563, %v1572
        %1575 = vrot.lane.b32.xlu0 %v1573, 30
        %v1576 = vpop.permute.xlu0 %1575
        %v1577 = vrot.slane %v1576, 7
        %v1578 = vsel %vm1341, %v1577, %v1576
        %v1580 = vadd.f32 %v1554, %v1578
        %s1581 = scalar_lea.vmem [#allocation7], 85
        %v1582 = vld [vmem:[%s1581] ss:$8 sm:$0x3]
        %1584 = vrot.lane.b32.xlu0 %v1582, 48
        %v1585 = vpop.permute.xlu0 %1584
        %v1586 = vrot.slane %v1585, 7
        %v1587 = vsel %vm1331, %v1586, %v1585
        %v1589 = vmul.f32 %v1025, %v1587
        %s1590 = scalar_lea.vmem [#allocation7], 182
        %v1591 = vld [vmem:[%s1590] ss:$8 sm:$0x3]
        %1593 = vrot.lane.b32.xlu0 %v1591, 48
        %v1594 = vpop.permute.xlu0 %1593
        %v1595 = vrot.slane %v1594, 7
        %v1596 = vsel %vm1331, %v1595, %v1594
        %v1598 = vmul.f32 %v1036, %v1596
        %v1599 = vadd.f32 %v1589, %v1598
        %1601 = vrot.lane.b32.xlu0 %v1599, 29
        %v1602 = vpop.permute.xlu0 %1601
        %v1603 = vrot.slane %v1602, 7
        %v1604 = vsel %vm1313, %v1603, %v1602
        %v1606 = vadd.f32 %v1580, %v1604
        %s1607 = scalar_lea.vmem [#allocation7], 86
        %v1608 = vld [vmem:[%s1607] ss:$8 sm:$0x3]
        %1610 = vrot.lane.b32.xlu0 %v1608, 49
        %v1611 = vpop.permute.xlu0 %1610
        %v1612 = vrot.slane %v1611, 7
        %vm1613 = vcmask 400384
        %v1614 = vsel %vm1613, %v1612, %v1611
        %v1616 = vmul.f32 %v1025, %v1614
        %s1617 = scalar_lea.vmem [#allocation7], 183
        %v1618 = vld [vmem:[%s1617] ss:$8 sm:$0x3]
        %1620 = vrot.lane.b32.xlu0 %v1618, 49
        %v1621 = vpop.permute.xlu0 %1620
        %v1622 = vrot.slane %v1621, 7
        %v1623 = vsel %vm1613, %v1622, %v1621
        %v1625 = vmul.f32 %v1036, %v1623
        %v1626 = vadd.f32 %v1616, %v1625
        %1628 = vrot.lane.b32.xlu0 %v1626, 28
        %v1629 = vpop.permute.xlu0 %1628
        %v1630 = vrot.slane %v1629, 7
        %vm1631 = vcmask 228352
        %v1632 = vsel %vm1631, %v1630, %v1629
        %v1634 = vadd.f32 %v1606, %v1632
        %s1635 = scalar_lea.vmem [#allocation7], 87
        %v1636 = vld [vmem:[%s1635] ss:$8 sm:$0x3]
        %1638 = vrot.lane.b32.xlu0 %v1636, 50
        %v1639 = vpop.permute.xlu0 %1638
        %v1640 = vrot.slane %v1639, 7
        %vm1641 = vcmask 408576
        %v1642 = vsel %vm1641, %v1640, %v1639
        %v1644 = vmul.f32 %v1025, %v1642
        %s1645 = scalar_lea.vmem [#allocation7], 192
        %v1646 = vld [vmem:[%s1645] ss:$8 sm:$0x3]
        %1648 = vrot.lane.b32.xlu0 %v1646, 50
        %v1649 = vpop.permute.xlu0 %1648
        %v1650 = vrot.slane %v1649, 7
        %v1651 = vsel %vm1641, %v1650, %v1649
        %v1653 = vmul.f32 %v1036, %v1651
        %v1654 = vadd.f32 %v1644, %v1653
        %1656 = vrot.lane.b32.xlu0 %v1654, 27
        %v1657 = vpop.permute.xlu0 %1656
        %v1658 = vrot.slane %v1657, 7
        %vm1659 = vcmask 220160
        %v1660 = vsel %vm1659, %v1658, %v1657
        %v1662 = vadd.f32 %v1634, %v1660
        %s1663 = scalar_lea.vmem [#allocation7], 96
        %v1664 = vld [vmem:[%s1663] ss:$8 sm:$0x3]
        %1666 = vrot.lane.b32.xlu0 %v1664, 51
        %v1667 = vpop.permute.xlu0 %1666
        %v1668 = vrot.slane %v1667, 7
        %vm1669 = vcmask 416768
        %v1670 = vsel %vm1669, %v1668, %v1667
        %v1672 = vmul.f32 %v1025, %v1670
        %s1673 = scalar_lea.vmem [#allocation7], 193
        %v1674 = vld [vmem:[%s1673] ss:$8 sm:$0x3]
        %1676 = vrot.lane.b32.xlu0 %v1674, 51
        %v1677 = vpop.permute.xlu0 %1676
        %v1678 = vrot.slane %v1677, 7
        %v1679 = vsel %vm1669, %v1678, %v1677
        %v1681 = vmul.f32 %v1036, %v1679
        %v1682 = vadd.f32 %v1672, %v1681
        %1684 = vrot.lane.b32.xlu0 %v1682, 26
        %v1685 = vpop.permute.xlu0 %1684
        %v1686 = vrot.slane %v1685, 7
        %vm1687 = vcmask 211968
        %v1688 = vsel %vm1687, %v1686, %v1685
        %v1690 = vadd.f32 %v1662, %v1688
        %v1691 = vxor.u32 %v1690, 2147483648
        %v1692 = vmul.f32 %v1691, 1.442695
        %v1693 = vpow.pop %v1692
        %v1694 = vadd.f32 %v1693, 1.0
        %v1695 = vrcp.pop %v1694
        %v1696 = vmul.f32 1.0, %v1695
        %1698 = vrot.lane.b32.xlu0 %v1696, 51
        %v1699 = vpop.permute.xlu0 %1698
        %v1700 = vrot.slane %v1699, 1
        %v1701 = vsel %vm1669, %v1699, %v1700
        %1703 = vst.msk [vmem:[%s176] sm:$0x3] %vm336, %v1701
        %s1704 = sand.u32 %s75, 1
        %s1705 = scalar_lea.sflag [#allocation6], %s1704
        %s1706 = sand.u32 %s75, 1
        %s1707 = smul.addr %s1706, 2
        %s1708 = scalar_lea.vmem [#allocation9], %s1707
        // Predicated region
        $region37: #{tpu_custom_call.1} parent=27 // pred_check
          %p1709 = pneg %p85
        $region38: #{tpu_custom_call.1} parent=27 // pred_check_branch
          %1711 = sbr.rel (%p1709) target = $region40
        $region39: #{tpu_custom_call.1} parent=27 // pred_region
          %s1713 = ssub.s32 32, 32
          %1714 = vsyncadd %s1705, %s1713
          %s1715 = smul.addr %s20, 2
          %s1716 = smul.addr %s1715, 16
          %s1717 = scalar_lea.hbm %s2, %s1716
          %s1719 = sshll.u32 %s1708, 4
          %s1720 = int_to_ptr.vmem [resolvable:$true] %s1719
          %1722 = dma.vmem_to_hbm [thread:$0]  %s1720, 32, %s1717, %s1705
        $region40: #{tpu_custom_call.1} parent=27 // pred_fallthru
          _
      $region28: #{tpu_custom_call.1} parent=5 // pred_fallthru
        _
      %p1723 = scmp.le.s32.totalorder 2, %s15
      // Predicated region
      $region41: #{tpu_custom_call.1} parent=5 // pred_check
        %p1724 = pneg %p1723
      $region42: #{tpu_custom_call.1} parent=5 // pred_check_branch
        %1726 = sbr.rel (%p1724) target = $region44
      $region43: #{tpu_custom_call.1} parent=5 // pred_region
        %s1727 = ssub.s32 %s15, 2
        // Predicated region
        $region45: #{tpu_custom_call.1} parent=43 // pred_check
          %p1728 = pneg %p91
        $region46: #{tpu_custom_call.1} parent=43 // pred_check_branch
          %1730 = sbr.rel (%p1728) target = $region48
        $region47: #{tpu_custom_call.1} parent=43 // pred_region
          %s1731 = sand.u32 %s76, 1
          %s1732 = scalar_lea.sflag [#allocation6], %s1731
          %s1733 = sand.u32 %s76, 1
          %s1734 = smul.addr %s1733, 2
          %s1735 = scalar_lea.vmem [#allocation9], %s1734
          %1736 = dma.done %s1732, 32
        $region48: #{tpu_custom_call.1} parent=43 // pred_fallthru
          _
      $region44: #{tpu_custom_call.1} parent=5 // pred_fallthru
        _
    $region6: #{tpu_custom_call.1} parent=1 // loop_footer
      %s19 = sadd.s32 1, %s15
    $region7: #{tpu_custom_call.1} parent=1 // loop_footer_branch
      %14 = sbr.rel target = $region3
    $region8: #{tpu_custom_call.1} parent=1 // loop_exit
      _
    %1737 = vsyncpa [#allocation5], 1
    %s1738 = scalar_lea.sflag [#allocation5], 1
    %1739 = vsyncpa %s1738, 1
    %1740 = vsyncpa [#allocation8], 1
    %1741 = vsyncpa [#allocation6], 1
    %s1742 = scalar_lea.sflag [#allocation6], 1
    %1743 = vsyncpa %s1742, 1

</llo_original>
